<compile_context>
chip_gen: v6e
topology: v6e:2x2x1
jax: 0.10.0
libtpu: 0.0.40
codegen_flags: <defaults>
</compile_context>

<pallas_src>
import jax
import jax.numpy as jnp
from jax.experimental import pallas as pl
from jax.experimental.pallas import tpu as pltpu

HIDDEN = 100          # logical hidden width (nn.Linear(*, 100))
NUM_CLASSES = 10      # logical output width
HIDDEN_PAD = 128      # padded to full lane width
OUT_PAD = 128
SUBLANE = 8
TILE_B_DEFAULT = 256  # batch tile: >= MXU height on v6e/v7x, multiple of 8


def _round_up(x, m):
    return (x + m - 1) // m * m


def _pad2(a, rows, cols):
    return jnp.pad(a, ((0, rows - a.shape[0]), (0, cols - a.shape[1])))


def _dnn_kernel(x_ref, w1_ref, wstack_ref, bstack_ref, o_ref):
    """One batch tile through all 6 layers.

    x_ref:      (TILE_B, F_pad)      bf16
    w1_ref:     (F_pad, 128)         bf16
    wstack_ref: (5, 128, 128)        bf16   (hidden2..5 weights + output weight)
    bstack_ref: (6, 128)             f32    (all biases, zero-padded lanes)
    o_ref:      (TILE_B, 128)        f32
    Zero-padded weight/bias lanes stay exactly zero through ReLU, so padding
    never contaminates real outputs.
    """
    biases = bstack_ref[...]                                   # (6, 128) f32

    # Layer 1: bf16 x bf16 -> f32 accumulate on the MXU, epilogue in f32.
    h = jnp.dot(x_ref[...], w1_ref[...], preferred_element_type=jnp.float32)
    h = jnp.maximum(h + biases[0][None, :], 0.0)

    # Layers 2..5 (Linear + ReLU, dropout = identity) and output layer (no ReLU).
    for i in range(5):
        w = wstack_ref[i]                                      # (128, 128) bf16
        y = jnp.dot(h.astype(jnp.bfloat16), w,
                    preferred_element_type=jnp.float32)
        y = y + biases[i + 1][None, :]
        h = jnp.maximum(y, 0.0) if i < 4 else y

    o_ref[...] = h


def init_params(key, num_features):
    """Deterministic init mirroring nn.Linear default (U[-1/sqrt(fan_in), +])."""
    dims = [num_features] + [HIDDEN] * 5 + [NUM_CLASSES]
    params = []
    for i in range(6):
        fan_in, fan_out = dims[i], dims[i + 1]
        key, kw, kb = jax.random.split(key, 3)
        bound = 1.0 / jnp.sqrt(jnp.float32(fan_in))
        w = jax.random.uniform(kw, (fan_in, fan_out), jnp.float32, -bound, bound)
        b = jax.random.uniform(kb, (fan_out,), jnp.float32, -bound, bound)
        params.append((w, b))
    return params


def dnn_forward(x, params, tile_b=TILE_B_DEFAULT):
    """x: [B, num_features] float32  ->  logits [B, 10] float32."""
    B, F = x.shape
    F_pad = _round_up(F, 128)
    tile_b = max(SUBLANE, _round_up(tile_b, SUBLANE))
    B_pad = _round_up(max(B, tile_b), tile_b)
    n_tiles = B_pad // tile_b

    # Activations: bf16 MXU operands (halves input DMA bytes too).
    x_p = _pad2(x.astype(jnp.float32), B_pad, F_pad).astype(jnp.bfloat16)

    # Pack parameters: w1 separate (F-dependent), remaining 5 weights stacked,
    # all 6 biases stacked. Weights bf16, biases f32 (added post-accumulate).
    w1, _ = params[0]
    w1_p = _pad2(w1, F_pad, HIDDEN_PAD).astype(jnp.bfloat16)
    w_stack = jnp.stack(
        [_pad2(w, HIDDEN_PAD, OUT_PAD).astype(jnp.bfloat16) for (w, _) in params[1:]],
        axis=0)                                                # (5, 128, 128)
    b_stack = jnp.stack(
        [_pad2(b[None, :], 1, OUT_PAD)[0] for (_, b) in params],
        axis=0).astype(jnp.float32)                            # (6, 128)

    # VMEM budget: double-buffered in/out tiles + resident weights + headroom.
    in_tile_bytes = tile_b * F_pad * 2
    out_tile_bytes = tile_b * OUT_PAD * 4
    weight_bytes = (F_pad * HIDDEN_PAD * 2
                    + 5 * HIDDEN_PAD * HIDDEN_PAD * 2
                    + 6 * OUT_PAD * 4)
    act_bytes = tile_b * HIDDEN_PAD * 4
    vmem_limit = int(2 * in_tile_bytes + 2 * out_tile_bytes
                     + 2 * weight_bytes + 8 * act_bytes + (4 << 20))

    flops = 2 * B_pad * (F_pad * HIDDEN_PAD + 5 * HIDDEN_PAD * HIDDEN_PAD)
    bytes_accessed = (x_p.size * 2 + w1_p.size * 2 + w_stack.size * 2
                      + b_stack.size * 4 + B_pad * OUT_PAD * 4)

    out_p = pl.pallas_call(
        _dnn_kernel,
        out_shape=jax.ShapeDtypeStruct((B_pad, OUT_PAD), jnp.float32),
        grid=(n_tiles,),
        in_specs=[
            pl.BlockSpec((tile_b, F_pad), lambda i: (i, 0)),             # x tile
            pl.BlockSpec((F_pad, HIDDEN_PAD), lambda i: (0, 0)),         # w1 (resident)
            pl.BlockSpec((5, HIDDEN_PAD, HIDDEN_PAD), lambda i: (0, 0, 0)),  # w2..w6
            pl.BlockSpec((6, OUT_PAD), lambda i: (0, 0)),                # biases
        ],
        out_specs=pl.BlockSpec((tile_b, OUT_PAD), lambda i: (i, 0)),
        compiler_params=pltpu.CompilerParams(
            dimension_semantics=("parallel",),
            vmem_limit_bytes=vmem_limit),
        cost_estimate=pl.CostEstimate(
            flops=flops, transcendentals=0, bytes_accessed=bytes_accessed),
    )(x_p, w1_p, w_stack, b_stack)

    return out_p[:B, :NUM_CLASSES]


def dnn_reference(x, params):
    """Pure-JAX reference mimicking the kernel numerics (bf16 MXU operands,
    f32 accumulate; dropout = identity, eval mode)."""
    h = x.astype(jnp.bfloat16)
    for i, (w, b) in enumerate(params):
        y = jnp.dot(h, w.astype(jnp.bfloat16),
                    preferred_element_type=jnp.float32) + b
        h = jnp.maximum(y, 0.0).astype(jnp.bfloat16) if i < 5 else y
    return h


if __name__ == "__main__":
    key = jax.random.PRNGKey(0)
    k_x, k_p = jax.random.split(key)

    # Small CIFAR10-like flattened input: batch=8, num_features=32.
    B, NUM_FEATURES = 8, 32
    x = jax.random.normal(k_x, (B, NUM_FEATURES), jnp.float32)
    params = init_params(k_p, NUM_FEATURES)

    out = jax.block_until_ready(dnn_forward(x, params))
    ref = dnn_reference(x, params)

    assert out.shape == (B, NUM_CLASSES), out.shape
    max_err = float(jnp.max(jnp.abs(out - ref)))
    assert max_err < 1e-2, max_err

    print("KERNEL_OK")
</pallas_src>

<mosaic_0001>
module attributes {stable_mosaic.version = 11 : i64} {
  func.func @_dnn_kernel(%arg0: i32, %arg1: memref<256x128xbf16, #tpu.memory_space<vmem>>, %arg2: memref<128x128xbf16, #tpu.memory_space<vmem>>, %arg3: memref<5x128x128xbf16, #tpu.memory_space<vmem>>, %arg4: memref<6x128xf32, #tpu.memory_space<vmem>>, %arg5: memref<256x128xf32, #tpu.memory_space<vmem>>) attributes {dimension_semantics = [#tpu.dimension_semantics<parallel>], iteration_bounds = array<i64: 1>, scalar_prefetch = 0 : i64, scratch_operands = 0 : i64, tpu.core_type = #tpu.core_type<tc>, window_params = [{transform_indices = @transform_0, window_bounds = array<i64: 256, 128>}, {pipeline_mode = #tpu.pipeline_mode<synchronous>, transform_indices = @transform_1, window_bounds = array<i64: 128, 128>}, {pipeline_mode = #tpu.pipeline_mode<synchronous>, transform_indices = @transform_2, window_bounds = array<i64: 5, 128, 128>}, {pipeline_mode = #tpu.pipeline_mode<synchronous>, transform_indices = @transform_3, window_bounds = array<i64: 6, 128>}, {transform_indices = @transform_4, window_bounds = array<i64: 256, 128>}]} {
    %c0 = arith.constant 0 : index
    %c0_0 = arith.constant 0 : index
    %0 = vector.load %arg4[%c0, %c0_0] : memref<6x128xf32, #tpu.memory_space<vmem>>, vector<6x128xf32>
    %c0_1 = arith.constant 0 : index
    %c0_2 = arith.constant 0 : index
    %1 = vector.load %arg1[%c0_1, %c0_2] : memref<256x128xbf16, #tpu.memory_space<vmem>>, vector<256x128xbf16>
    %c0_3 = arith.constant 0 : index
    %c0_4 = arith.constant 0 : index
    %2 = vector.load %arg2[%c0_3, %c0_4] : memref<128x128xbf16, #tpu.memory_space<vmem>>, vector<128x128xbf16>
    %cst = arith.constant dense<0.000000e+00> : vector<256x128xf32>
    %3 = tpu.matmul %1, %2, %cst {dimension_numbers = #tpu.dot_dimension_numbers<[1], [0], [0], [1], [0, 0, 1, 1], [], []>} : vector<256x128xbf16>, vector<128x128xbf16>, vector<256x128xf32> -> vector<256x128xf32>
    %4 = vector.extract_strided_slice %0 {offsets = [0, 0], sizes = [1, 128], strides = [1, 1]} : vector<6x128xf32> to vector<1x128xf32>
    %5 = vector.shape_cast %4 : vector<1x128xf32> to vector<128xf32>
    %6 = vector.shape_cast %5 : vector<128xf32> to vector<1x128xf32>
    %7 = vector.broadcast %6 : vector<1x128xf32> to vector<256x128xf32>
    %8 = arith.addf %3, %7 : vector<256x128xf32>
    %cst_5 = arith.constant 0.000000e+00 : f32
    %9 = vector.broadcast %cst_5 : f32 to vector<256x128xf32>
    %10 = arith.maximumf %8, %9 : vector<256x128xf32>
    %c0_6 = arith.constant 0 : index
    %c0_7 = arith.constant 0 : index
    %c0_8 = arith.constant 0 : index
    %11 = vector.load %arg3[%c0_6, %c0_7, %c0_8] : memref<5x128x128xbf16, #tpu.memory_space<vmem>>, vector<1x128x128xbf16>
    %12 = vector.shape_cast %11 : vector<1x128x128xbf16> to vector<128x128xbf16>
    %13 = arith.truncf %10 : vector<256x128xf32> to vector<256x128xbf16>
    %cst_9 = arith.constant dense<0.000000e+00> : vector<256x128xf32>
    %14 = tpu.matmul %13, %12, %cst_9 {dimension_numbers = #tpu.dot_dimension_numbers<[1], [0], [0], [1], [0, 0, 1, 1], [], []>} : vector<256x128xbf16>, vector<128x128xbf16>, vector<256x128xf32> -> vector<256x128xf32>
    %15 = vector.extract_strided_slice %0 {offsets = [1, 0], sizes = [1, 128], strides = [1, 1]} : vector<6x128xf32> to vector<1x128xf32>
    %16 = vector.shape_cast %15 : vector<1x128xf32> to vector<128xf32>
    %17 = vector.shape_cast %16 : vector<128xf32> to vector<1x128xf32>
    %18 = vector.broadcast %17 : vector<1x128xf32> to vector<256x128xf32>
    %19 = arith.addf %14, %18 : vector<256x128xf32>
    %cst_10 = arith.constant 0.000000e+00 : f32
    %20 = vector.broadcast %cst_10 : f32 to vector<256x128xf32>
    %21 = arith.maximumf %19, %20 : vector<256x128xf32>
    %c1 = arith.constant 1 : index
    %c0_11 = arith.constant 0 : index
    %c0_12 = arith.constant 0 : index
    %22 = vector.load %arg3[%c1, %c0_11, %c0_12] : memref<5x128x128xbf16, #tpu.memory_space<vmem>>, vector<1x128x128xbf16>
    %23 = vector.shape_cast %22 : vector<1x128x128xbf16> to vector<128x128xbf16>
    %24 = arith.truncf %21 : vector<256x128xf32> to vector<256x128xbf16>
    %cst_13 = arith.constant dense<0.000000e+00> : vector<256x128xf32>
    %25 = tpu.matmul %24, %23, %cst_13 {dimension_numbers = #tpu.dot_dimension_numbers<[1], [0], [0], [1], [0, 0, 1, 1], [], []>} : vector<256x128xbf16>, vector<128x128xbf16>, vector<256x128xf32> -> vector<256x128xf32>
    %26 = vector.extract_strided_slice %0 {offsets = [2, 0], sizes = [1, 128], strides = [1, 1]} : vector<6x128xf32> to vector<1x128xf32>
    %27 = vector.shape_cast %26 : vector<1x128xf32> to vector<128xf32>
    %28 = vector.shape_cast %27 : vector<128xf32> to vector<1x128xf32>
    %29 = vector.broadcast %28 : vector<1x128xf32> to vector<256x128xf32>
    %30 = arith.addf %25, %29 : vector<256x128xf32>
    %cst_14 = arith.constant 0.000000e+00 : f32
    %31 = vector.broadcast %cst_14 : f32 to vector<256x128xf32>
    %32 = arith.maximumf %30, %31 : vector<256x128xf32>
    %c2 = arith.constant 2 : index
    %c0_15 = arith.constant 0 : index
    %c0_16 = arith.constant 0 : index
    %33 = vector.load %arg3[%c2, %c0_15, %c0_16] : memref<5x128x128xbf16, #tpu.memory_space<vmem>>, vector<1x128x128xbf16>
    %34 = vector.shape_cast %33 : vector<1x128x128xbf16> to vector<128x128xbf16>
    %35 = arith.truncf %32 : vector<256x128xf32> to vector<256x128xbf16>
    %cst_17 = arith.constant dense<0.000000e+00> : vector<256x128xf32>
    %36 = tpu.matmul %35, %34, %cst_17 {dimension_numbers = #tpu.dot_dimension_numbers<[1], [0], [0], [1], [0, 0, 1, 1], [], []>} : vector<256x128xbf16>, vector<128x128xbf16>, vector<256x128xf32> -> vector<256x128xf32>
    %37 = vector.extract_strided_slice %0 {offsets = [3, 0], sizes = [1, 128], strides = [1, 1]} : vector<6x128xf32> to vector<1x128xf32>
    %38 = vector.shape_cast %37 : vector<1x128xf32> to vector<128xf32>
    %39 = vector.shape_cast %38 : vector<128xf32> to vector<1x128xf32>
    %40 = vector.broadcast %39 : vector<1x128xf32> to vector<256x128xf32>
    %41 = arith.addf %36, %40 : vector<256x128xf32>
    %cst_18 = arith.constant 0.000000e+00 : f32
    %42 = vector.broadcast %cst_18 : f32 to vector<256x128xf32>
    %43 = arith.maximumf %41, %42 : vector<256x128xf32>
    %c3 = arith.constant 3 : index
    %c0_19 = arith.constant 0 : index
    %c0_20 = arith.constant 0 : index
    %44 = vector.load %arg3[%c3, %c0_19, %c0_20] : memref<5x128x128xbf16, #tpu.memory_space<vmem>>, vector<1x128x128xbf16>
    %45 = vector.shape_cast %44 : vector<1x128x128xbf16> to vector<128x128xbf16>
    %46 = arith.truncf %43 : vector<256x128xf32> to vector<256x128xbf16>
    %cst_21 = arith.constant dense<0.000000e+00> : vector<256x128xf32>
    %47 = tpu.matmul %46, %45, %cst_21 {dimension_numbers = #tpu.dot_dimension_numbers<[1], [0], [0], [1], [0, 0, 1, 1], [], []>} : vector<256x128xbf16>, vector<128x128xbf16>, vector<256x128xf32> -> vector<256x128xf32>
    %48 = vector.extract_strided_slice %0 {offsets = [4, 0], sizes = [1, 128], strides = [1, 1]} : vector<6x128xf32> to vector<1x128xf32>
    %49 = vector.shape_cast %48 : vector<1x128xf32> to vector<128xf32>
    %50 = vector.shape_cast %49 : vector<128xf32> to vector<1x128xf32>
    %51 = vector.broadcast %50 : vector<1x128xf32> to vector<256x128xf32>
    %52 = arith.addf %47, %51 : vector<256x128xf32>
    %cst_22 = arith.constant 0.000000e+00 : f32
    %53 = vector.broadcast %cst_22 : f32 to vector<256x128xf32>
    %54 = arith.maximumf %52, %53 : vector<256x128xf32>
    %c4 = arith.constant 4 : index
    %c0_23 = arith.constant 0 : index
    %c0_24 = arith.constant 0 : index
    %55 = vector.load %arg3[%c4, %c0_23, %c0_24] : memref<5x128x128xbf16, #tpu.memory_space<vmem>>, vector<1x128x128xbf16>
    %56 = vector.shape_cast %55 : vector<1x128x128xbf16> to vector<128x128xbf16>
    %57 = arith.truncf %54 : vector<256x128xf32> to vector<256x128xbf16>
    %cst_25 = arith.constant dense<0.000000e+00> : vector<256x128xf32>
    %58 = tpu.matmul %57, %56, %cst_25 {dimension_numbers = #tpu.dot_dimension_numbers<[1], [0], [0], [1], [0, 0, 1, 1], [], []>} : vector<256x128xbf16>, vector<128x128xbf16>, vector<256x128xf32> -> vector<256x128xf32>
    %59 = vector.extract_strided_slice %0 {offsets = [5, 0], sizes = [1, 128], strides = [1, 1]} : vector<6x128xf32> to vector<1x128xf32>
    %60 = vector.shape_cast %59 : vector<1x128xf32> to vector<128xf32>
    %61 = vector.shape_cast %60 : vector<128xf32> to vector<1x128xf32>
    %62 = vector.broadcast %61 : vector<1x128xf32> to vector<256x128xf32>
    %63 = arith.addf %58, %62 : vector<256x128xf32>
    %c0_26 = arith.constant 0 : index
    %c0_27 = arith.constant 0 : index
    %64 = vector.load %arg5[%c0_26, %c0_27] : memref<256x128xf32, #tpu.memory_space<vmem>>, vector<256x128xf32>
    tpu.vector_store %arg5[%c0_26, %c0_27], %63 {strides = array<i32>} : memref<256x128xf32, #tpu.memory_space<vmem>>, vector<256x128xf32>,
    return
  }
  func.func @transform_0(%arg0: i32) -> (i32, i32) {
    %c0_i32 = arith.constant 0 : i32
    %c0_i32_0 = arith.constant 0 : i32
    return %arg0, %c0_i32 : i32, i32
  }
  func.func @transform_1(%arg0: i32) -> (i32, i32) {
    %c0_i32 = arith.constant 0 : i32
    %c0_i32_0 = arith.constant 0 : i32
    %c0_i32_1 = arith.constant 0 : i32
    return %c0_i32, %c0_i32_0 : i32, i32
  }
  func.func @transform_2(%arg0: i32) -> (i32, i32, i32) {
    %c0_i32 = arith.constant 0 : i32
    %c0_i32_0 = arith.constant 0 : i32
    %c0_i32_1 = arith.constant 0 : i32
    %c0_i32_2 = arith.constant 0 : i32
    return %c0_i32, %c0_i32_0, %c0_i32_1 : i32, i32, i32
  }
  func.func @transform_3(%arg0: i32) -> (i32, i32) {
    %c0_i32 = arith.constant 0 : i32
    %c0_i32_0 = arith.constant 0 : i32
    %c0_i32_1 = arith.constant 0 : i32
    return %c0_i32, %c0_i32_0 : i32, i32
  }
  func.func @transform_4(%arg0: i32) -> (i32, i32) {
    %c0_i32 = arith.constant 0 : i32
    %c0_i32_0 = arith.constant 0 : i32
    return %arg0, %c0_i32 : i32, i32
  }
}

</mosaic_0001>

<llo_original>
// kernel: tpu_custom_call.1
$region0: #{tpu_custom_call.1}
  #allocation0 [shape = 'u32[]', space=smem, size = 0x4, offset = 0x4, fixed_abs, tag = 'smem constant byte address 0x4 - core index']
  #allocation1 [shape = 'u32[144,128]{1,0:T(1,128)}', space=vmem, size = 0x12000, scoped, tag = 'internal scratch']
  %s0 = inlined_call_operand.hbm [shape: bf16[256,128], index: 0, kind: input, shape index: {}]
  %s1 = inlined_call_operand.hbm [shape: bf16[128,128], index: 1, kind: input, shape index: {}]
  %s2 = inlined_call_operand.hbm [shape: bf16[5,128,128], index: 2, kind: input, shape index: {}]
  %s3 = inlined_call_operand.hbm [shape: f32[6,128], index: 3, kind: input, shape index: {}]
  %s4 = inlined_call_operand.hbm [shape: f32[256,128], index: 4, kind: output, shape index: {}]
  %s5 = sld [smem:[#allocation0]]
  $region42: #{tpu_custom_call.1} parent=0
    _
  %s7 = ssub.s32 1, %s5
  %s8 = scalar_select 0, %s7, %s5
  $region1: #{tpu_custom_call.1} parent=0
    #allocation2 [shape = 'u8[65536]{0}', space=vmem, size = 0x10000, scoped, tag = 'input window, operand 0, single buffered']
    #allocation3 [shape = 's32[1]{0}', space=sflag, size = 0x4, scoped, tag = 'scoped memory for tpu_custom_call.1']
    #allocation4 [shape = 's32[1]{0}', space=sflag, size = 0x4, scoped, tag = 'scoped memory for tpu_custom_call.1']
    #allocation5 [shape = 'u8[32768]{0}', space=vmem, size = 0x8000, scoped, tag = 'input window, operand 1, single buffered']
    #allocation6 [shape = 's32[1]{0}', space=sflag, size = 0x4, scoped, tag = 'scoped memory for tpu_custom_call.1']
    #allocation7 [shape = 'u8[163840]{0}', space=vmem, size = 0x28000, scoped, tag = 'input window, operand 2, single buffered']
    #allocation8 [shape = 'u8[4096]{0}', space=vmem, size = 0x1000, scoped, tag = 'input window, operand 3, single buffered']
    #allocation9 [shape = 's32[1]{0}', space=sflag, size = 0x4, scoped, tag = 'scoped memory for tpu_custom_call.1']
    #allocation10 [shape = 'u8[131072]{0}', space=vmem, size = 0x20000, scoped, tag = 'output window, operand 0, single buffered']
    %9 = vsyncpa [#allocation3], 0
    %10 = vsyncpa [#allocation6], 0
    %11 = vsyncpa [#allocation9], 0
    %12 = vsyncpa [#allocation4], 0
    // Predicated region
    $region2: #{tpu_custom_call.1} parent=1 // pred_check
      _
    $region3: #{tpu_custom_call.1} parent=1 // pred_check_branch
      %14 = sbr.rel (0) target = $region5
    $region4: #{tpu_custom_call.1} parent=1 // pred_region
      %s16 = ssub.s32 2048, 2048
      %17 = vsyncadd [#allocation3], %s16
      %s18 = sshll.u32 [#allocation2], 4
      %s19 = int_to_ptr.vmem [resolvable:$true] %s18
      %24 = dma.hbm_to_vmem [thread:$0]  %s0, 2048, %s19, [#allocation3], 64, 64, 4
    $region5: #{tpu_custom_call.1} parent=1 // pred_fallthru
      _
    // Predicated region
    $region6: #{tpu_custom_call.1} parent=1 // pred_check
      _
    $region7: #{tpu_custom_call.1} parent=1 // pred_check_branch
      %26 = sbr.rel (0) target = $region9
    $region8: #{tpu_custom_call.1} parent=1 // pred_region
      %s28 = ssub.s32 1024, 1024
      %29 = vsyncadd [#allocation6], %s28
      %s30 = sshll.u32 [#allocation5], 4
      %s31 = int_to_ptr.vmem [resolvable:$true] %s30
      %36 = dma.hbm_to_vmem [thread:$0]  %s1, 1024, %s31, [#allocation6], 64, 64, 4
    $region9: #{tpu_custom_call.1} parent=1 // pred_fallthru
      _
    // Predicated region
    $region10: #{tpu_custom_call.1} parent=1 // pred_check
      _
    $region11: #{tpu_custom_call.1} parent=1 // pred_check_branch
      %38 = sbr.rel (0) target = $region13
    $region12: #{tpu_custom_call.1} parent=1 // pred_region
      %s40 = ssub.s32 5120, 5120
      %41 = vsyncadd [#allocation6], %s40
      %s42 = sshll.u32 [#allocation7], 4
      %s43 = int_to_ptr.vmem [resolvable:$true] %s42
      %48 = dma.hbm_to_vmem [thread:$0]  %s2, 5120, %s43, [#allocation6], 64, 64, 4
    $region13: #{tpu_custom_call.1} parent=1 // pred_fallthru
      _
    // Predicated region
    $region14: #{tpu_custom_call.1} parent=1 // pred_check
      _
    $region15: #{tpu_custom_call.1} parent=1 // pred_check_branch
      %50 = sbr.rel (0) target = $region17
    $region16: #{tpu_custom_call.1} parent=1 // pred_region
      %s52 = ssub.s32 128, 128
      %53 = vsyncadd [#allocation9], %s52
      %s55 = sshll.u32 [#allocation8], 4
      %s56 = int_to_ptr.vmem [resolvable:$true] %s55
      %58 = dma.hbm_to_vmem [thread:$0]  %s3, 128, %s56, [#allocation9]
    $region17: #{tpu_custom_call.1} parent=1 // pred_fallthru
      _
    // Predicated region
    $region18: #{tpu_custom_call.1} parent=1 // pred_check
      _
    $region19: #{tpu_custom_call.1} parent=1 // pred_check_branch
      %60 = sbr.rel (0) target = $region21
    $region20: #{tpu_custom_call.1} parent=1 // pred_region
      %61 = dma.done [#allocation3], 2048
    $region21: #{tpu_custom_call.1} parent=1 // pred_fallthru
      _
    // Predicated region
    $region22: #{tpu_custom_call.1} parent=1 // pred_check
      _
    $region23: #{tpu_custom_call.1} parent=1 // pred_check_branch
      %63 = sbr.rel (0) target = $region25
    $region24: #{tpu_custom_call.1} parent=1 // pred_region
      %64 = dma.done [#allocation6], 1024
    $region25: #{tpu_custom_call.1} parent=1 // pred_fallthru
      _
    // Predicated region
    $region26: #{tpu_custom_call.1} parent=1 // pred_check
      _
    $region27: #{tpu_custom_call.1} parent=1 // pred_check_branch
      %66 = sbr.rel (0) target = $region29
    $region28: #{tpu_custom_call.1} parent=1 // pred_region
      %67 = dma.done [#allocation6], 5120
    $region29: #{tpu_custom_call.1} parent=1 // pred_fallthru
      _
    // Predicated region
    $region30: #{tpu_custom_call.1} parent=1 // pred_check
      _
    $region31: #{tpu_custom_call.1} parent=1 // pred_check_branch
      %69 = sbr.rel (0) target = $region33
    $region32: #{tpu_custom_call.1} parent=1 // pred_region
      %70 = dma.done [#allocation9], 128
    $region33: #{tpu_custom_call.1} parent=1 // pred_fallthru
      _
    %v72 = vld [vmem:[#allocation8] sm:$0x3f]
    %v73 = vld [vmem:[#allocation2] sm:$0xf]
    %v74 = vld [vmem:[#allocation2 + $0x4] sm:$0xf]
    %v75 = vld [vmem:[#allocation2 + $0x8] sm:$0xf]
    %v76 = vld [vmem:[#allocation2 + $0xc] sm:$0xf]
    %v77 = vld [vmem:[#allocation2 + $0x10] sm:$0xf]
    %v78 = vld [vmem:[#allocation2 + $0x14] sm:$0xf]
    %v79 = vld [vmem:[#allocation2 + $0x18] sm:$0xf]
    %v80 = vld [vmem:[#allocation2 + $0x1c] sm:$0xf]
    %v81 = vld [vmem:[#allocation2 + $0x20] sm:$0xf]
    %v82 = vld [vmem:[#allocation2 + $0x24] sm:$0xf]
    %v83 = vld [vmem:[#allocation2 + $0x28] sm:$0xf]
    %v84 = vld [vmem:[#allocation2 + $0x2c] sm:$0xf]
    %v85 = vld [vmem:[#allocation2 + $0x30] sm:$0xf]
    %v86 = vld [vmem:[#allocation2 + $0x34] sm:$0xf]
    %v87 = vld [vmem:[#allocation2 + $0x38] sm:$0xf]
    %v88 = vld [vmem:[#allocation2 + $0x3c] sm:$0xf]
    %v89 = vld [vmem:[#allocation2 + $0x40] sm:$0xf]
    %v90 = vld [vmem:[#allocation2 + $0x44] sm:$0xf]
    %v91 = vld [vmem:[#allocation2 + $0x48] sm:$0xf]
    %v92 = vld [vmem:[#allocation2 + $0x4c] sm:$0xf]
    %v93 = vld [vmem:[#allocation2 + $0x50] sm:$0xf]
    %v94 = vld [vmem:[#allocation2 + $0x54] sm:$0xf]
    %v95 = vld [vmem:[#allocation2 + $0x58] sm:$0xf]
    %v96 = vld [vmem:[#allocation2 + $0x5c] sm:$0xf]
    %v97 = vld [vmem:[#allocation2 + $0x60] sm:$0xf]
    %v98 = vld [vmem:[#allocation2 + $0x64] sm:$0xf]
    %v99 = vld [vmem:[#allocation2 + $0x68] sm:$0xf]
    %v100 = vld [vmem:[#allocation2 + $0x6c] sm:$0xf]
    %v101 = vld [vmem:[#allocation2 + $0x70] sm:$0xf]
    %v102 = vld [vmem:[#allocation2 + $0x74] sm:$0xf]
    %v103 = vld [vmem:[#allocation2 + $0x78] sm:$0xf]
    %v104 = vld [vmem:[#allocation2 + $0x7c] sm:$0xf]
    %v105 = vld [vmem:[#allocation5] sm:$0xf]
    %v106 = vld [vmem:[#allocation5 + $0x4] sm:$0xf]
    %v107 = vld [vmem:[#allocation5 + $0x8] sm:$0xf]
    %v108 = vld [vmem:[#allocation5 + $0xc] sm:$0xf]
    %v109 = vld [vmem:[#allocation5 + $0x10] sm:$0xf]
    %v110 = vld [vmem:[#allocation5 + $0x14] sm:$0xf]
    %v111 = vld [vmem:[#allocation5 + $0x18] sm:$0xf]
    %v112 = vld [vmem:[#allocation5 + $0x1c] sm:$0xf]
    %v113 = vld [vmem:[#allocation5 + $0x20] sm:$0xf]
    %v114 = vld [vmem:[#allocation5 + $0x24] sm:$0xf]
    %v115 = vld [vmem:[#allocation5 + $0x28] sm:$0xf]
    %v116 = vld [vmem:[#allocation5 + $0x2c] sm:$0xf]
    %v117 = vld [vmem:[#allocation5 + $0x30] sm:$0xf]
    %v118 = vld [vmem:[#allocation5 + $0x34] sm:$0xf]
    %v119 = vld [vmem:[#allocation5 + $0x38] sm:$0xf]
    %v120 = vld [vmem:[#allocation5 + $0x3c] sm:$0xf]
    %v121 = vlaneseq
    %v122 = vshrl.u32 %v121, 7
    %v123 = vsub.s32 0, %v122
    %v124 = vrot.slane %v72, %v123
    %v157 = vunpack.c.l.b16 %v73
    %v158 = vunpack.c.l.b16 %v74
    %v159 = vunpack.c.l.b16 %v75
    %v160 = vunpack.c.l.b16 %v76
    %v161 = vunpack.c.l.b16 %v77
    %v162 = vunpack.c.l.b16 %v78
    %v163 = vunpack.c.l.b16 %v79
    %v164 = vunpack.c.l.b16 %v80
    %v165 = vunpack.c.l.b16 %v81
    %v166 = vunpack.c.l.b16 %v82
    %v167 = vunpack.c.l.b16 %v83
    %v168 = vunpack.c.l.b16 %v84
    %v169 = vunpack.c.l.b16 %v85
    %v170 = vunpack.c.l.b16 %v86
    %v171 = vunpack.c.l.b16 %v87
    %v172 = vunpack.c.l.b16 %v88
    %v173 = vunpack.c.l.b16 %v89
    %v174 = vunpack.c.l.b16 %v90
    %v175 = vunpack.c.l.b16 %v91
    %v176 = vunpack.c.l.b16 %v92
    %v177 = vunpack.c.l.b16 %v93
    %v178 = vunpack.c.l.b16 %v94
    %v179 = vunpack.c.l.b16 %v95
    %v180 = vunpack.c.l.b16 %v96
    %v181 = vunpack.c.l.b16 %v97
    %v182 = vunpack.c.l.b16 %v98
    %v183 = vunpack.c.l.b16 %v99
    %v184 = vunpack.c.l.b16 %v100
    %v185 = vunpack.c.l.b16 %v101
    %v186 = vunpack.c.l.b16 %v102
    %v187 = vunpack.c.l.b16 %v103
    %v188 = vunpack.c.l.b16 %v104
    %v189 = vpack.c.b16 %v158, %v157
    %v190 = vpack.c.b16 %v160, %v159
    %v191 = vpack.c.b16 %v162, %v161
    %v192 = vpack.c.b16 %v164, %v163
    %v193 = vpack.c.b16 %v166, %v165
    %v194 = vpack.c.b16 %v168, %v167
    %v195 = vpack.c.b16 %v170, %v169
    %v196 = vpack.c.b16 %v172, %v171
    %v197 = vpack.c.b16 %v174, %v173
    %v198 = vpack.c.b16 %v176, %v175
    %v199 = vpack.c.b16 %v178, %v177
    %v200 = vpack.c.b16 %v180, %v179
    %v201 = vpack.c.b16 %v182, %v181
    %v202 = vpack.c.b16 %v184, %v183
    %v203 = vpack.c.b16 %v186, %v185
    %v204 = vpack.c.b16 %v188, %v187
    %v237 = vunpack.c.l.b16 %v105
    %v238 = vunpack.c.l.b16 %v106
    %v239 = vunpack.c.l.b16 %v107
    %v240 = vunpack.c.l.b16 %v108
    %v241 = vunpack.c.l.b16 %v109
    %v242 = vunpack.c.l.b16 %v110
    %v243 = vunpack.c.l.b16 %v111
    %v244 = vunpack.c.l.b16 %v112
    %v245 = vunpack.c.l.b16 %v113
    %v246 = vunpack.c.l.b16 %v114
    %v247 = vunpack.c.l.b16 %v115
    %v248 = vunpack.c.l.b16 %v116
    %v249 = vunpack.c.l.b16 %v117
    %v250 = vunpack.c.l.b16 %v118
    %v251 = vunpack.c.l.b16 %v119
    %v252 = vunpack.c.l.b16 %v120
    %v253 = vpack.c.b16 %v238, %v237
    %v254 = vpack.c.b16 %v240, %v239
    %v255 = vpack.c.b16 %v242, %v241
    %v256 = vpack.c.b16 %v244, %v243
    %v257 = vpack.c.b16 %v246, %v245
    %v258 = vpack.c.b16 %v248, %v247
    %v259 = vpack.c.b16 %v250, %v249
    %v260 = vpack.c.b16 %v252, %v251
    %269 = vmatprep.subr.bf16.mxu0 0
    %270 = vmatpush1.bf16.msra.mxu0 %v260
    %271 = vmatprep.subr.bf16.mxu0 0
    %272 = vmatpush1.bf16.msra.mxu0 %v259
    %273 = vmatprep.subr.bf16.mxu0 0
    %274 = vmatpush1.bf16.msra.mxu0 %v258
    %275 = vmatprep.subr.bf16.mxu0 0
    %276 = vmatpush1.bf16.msra.mxu0 %v257
    %277 = vmatprep.subr.bf16.mxu0 0
    %278 = vmatpush1.bf16.msra.mxu0 %v256
    %279 = vmatprep.subr.bf16.mxu0 0
    %280 = vmatpush1.bf16.msra.mxu0 %v255
    %281 = vmatprep.subr.bf16.mxu0 0
    %282 = vmatpush1.bf16.msra.mxu0 %v254
    %283 = vmatprep.subr.bf16.mxu0 0
    %284 = vmatpush1.bf16.msra.mxu0 %v253
    %285 = vmatprep.subr.bf16.mxu0 0
    %286 = vmatpush2.bf16.msra.mxu0 0
    %287 = vmatprep.subr.bf16.mxu0 0
    %288 = vmatpush2.bf16.msra.mxu0 0
    %289 = vmatprep.subr.bf16.mxu0 0
    %290 = vmatpush2.bf16.msra.mxu0 0
    %291 = vmatprep.subr.bf16.mxu0 0
    %292 = vmatpush2.bf16.msra.mxu0 0
    %293 = vmatprep.subr.bf16.mxu0 0
    %294 = vmatpush2.bf16.msra.mxu0 0
    %295 = vmatprep.subr.bf16.mxu0 0
    %296 = vmatpush2.bf16.msra.mxu0 0
    %297 = vmatprep.subr.bf16.mxu0 0
    %298 = vmatpush2.bf16.msra.mxu0 0
    %299 = vmatprep.subr.bf16.mxu0 0
    %300 = vmatpush2.bf16.msra.mxu0 0
    %301 = vmatprep.mubr.bf16.mxu0 0
    %302 = vmatmul.mubr.bf16.gmra.mxu0 %v189
    %v303 = vpop.f32.mrf.mxu0
    %v304 = vadd.f32 %v124, %v303
    %v305 = vpop.f32.mrf.mxu0
    %v306 = vpop.f32.mrf.mxu0
    %v307 = vadd.f32 %v124, %v306
    %v308 = vpop.f32.mrf.mxu0
    %309 = vmatprep.mubr.bf16.mxu0 0
    %310 = vmatmul.mubr.bf16.gmra.mxu0 %v190
    %v311 = vpop.f32.mrf.mxu0
    %v312 = vadd.f32 %v124, %v311
    %v313 = vpop.f32.mrf.mxu0
    %v314 = vpop.f32.mrf.mxu0
    %v315 = vadd.f32 %v124, %v314
    %v316 = vpop.f32.mrf.mxu0
    %317 = vmatprep.mubr.bf16.mxu0 0
    %318 = vmatmul.mubr.bf16.gmra.mxu0 %v191
    %v319 = vpop.f32.mrf.mxu0
    %v320 = vadd.f32 %v124, %v319
    %v321 = vpop.f32.mrf.mxu0
    %v322 = vpop.f32.mrf.mxu0
    %v323 = vadd.f32 %v124, %v322
    %v324 = vpop.f32.mrf.mxu0
    %325 = vmatprep.mubr.bf16.mxu0 0
    %326 = vmatmul.mubr.bf16.gmra.mxu0 %v192
    %v327 = vpop.f32.mrf.mxu0
    %v328 = vadd.f32 %v124, %v327
    %v329 = vpop.f32.mrf.mxu0
    %v330 = vpop.f32.mrf.mxu0
    %v331 = vadd.f32 %v124, %v330
    %v332 = vpop.f32.mrf.mxu0
    %333 = vmatprep.mubr.bf16.mxu0 0
    %334 = vmatmul.mubr.bf16.gmra.mxu0 %v193
    %v335 = vpop.f32.mrf.mxu0
    %v336 = vadd.f32 %v124, %v335
    %v337 = vpop.f32.mrf.mxu0
    %v338 = vpop.f32.mrf.mxu0
    %v339 = vadd.f32 %v124, %v338
    %v340 = vpop.f32.mrf.mxu0
    %341 = vmatprep.mubr.bf16.mxu0 0
    %342 = vmatmul.mubr.bf16.gmra.mxu0 %v194
    %v343 = vpop.f32.mrf.mxu0
    %v344 = vadd.f32 %v124, %v343
    %v345 = vpop.f32.mrf.mxu0
    %v346 = vpop.f32.mrf.mxu0
    %v347 = vadd.f32 %v124, %v346
    %v348 = vpop.f32.mrf.mxu0
    %349 = vmatprep.mubr.bf16.mxu0 0
    %350 = vmatmul.mubr.bf16.gmra.mxu0 %v195
    %v351 = vpop.f32.mrf.mxu0
    %v352 = vadd.f32 %v124, %v351
    %v353 = vpop.f32.mrf.mxu0
    %v354 = vpop.f32.mrf.mxu0
    %v355 = vadd.f32 %v124, %v354
    %v356 = vpop.f32.mrf.mxu0
    %357 = vmatprep.mubr.bf16.mxu0 0
    %358 = vmatmul.mubr.bf16.gmra.mxu0 %v196
    %v359 = vpop.f32.mrf.mxu0
    %v360 = vadd.f32 %v124, %v359
    %v361 = vpop.f32.mrf.mxu0
    %v362 = vpop.f32.mrf.mxu0
    %v363 = vadd.f32 %v124, %v362
    %v364 = vpop.f32.mrf.mxu0
    %365 = vmatprep.mubr.bf16.mxu0 0
    %366 = vmatmul.mubr.bf16.gmra.mxu0 %v197
    %v367 = vpop.f32.mrf.mxu0
    %v368 = vadd.f32 %v124, %v367
    %v369 = vpop.f32.mrf.mxu0
    %v370 = vpop.f32.mrf.mxu0
    %v371 = vadd.f32 %v124, %v370
    %v372 = vpop.f32.mrf.mxu0
    %373 = vmatprep.mubr.bf16.mxu0 0
    %374 = vmatmul.mubr.bf16.gmra.mxu0 %v198
    %v375 = vpop.f32.mrf.mxu0
    %v376 = vadd.f32 %v124, %v375
    %v377 = vpop.f32.mrf.mxu0
    %v378 = vpop.f32.mrf.mxu0
    %v379 = vadd.f32 %v124, %v378
    %v380 = vpop.f32.mrf.mxu0
    %381 = vmatprep.mubr.bf16.mxu0 0
    %382 = vmatmul.mubr.bf16.gmra.mxu0 %v199
    %v383 = vpop.f32.mrf.mxu0
    %v384 = vadd.f32 %v124, %v383
    %v385 = vpop.f32.mrf.mxu0
    %v386 = vpop.f32.mrf.mxu0
    %v387 = vadd.f32 %v124, %v386
    %v388 = vpop.f32.mrf.mxu0
    %389 = vmatprep.mubr.bf16.mxu0 0
    %390 = vmatmul.mubr.bf16.gmra.mxu0 %v200
    %v391 = vpop.f32.mrf.mxu0
    %v392 = vadd.f32 %v124, %v391
    %v393 = vpop.f32.mrf.mxu0
    %v394 = vpop.f32.mrf.mxu0
    %v395 = vadd.f32 %v124, %v394
    %v396 = vpop.f32.mrf.mxu0
    %397 = vmatprep.mubr.bf16.mxu0 0
    %398 = vmatmul.mubr.bf16.gmra.mxu0 %v201
    %v399 = vpop.f32.mrf.mxu0
    %v400 = vadd.f32 %v124, %v399
    %v401 = vpop.f32.mrf.mxu0
    %v402 = vpop.f32.mrf.mxu0
    %v403 = vadd.f32 %v124, %v402
    %v404 = vpop.f32.mrf.mxu0
    %405 = vmatprep.mubr.bf16.mxu0 0
    %406 = vmatmul.mubr.bf16.gmra.mxu0 %v202
    %v407 = vpop.f32.mrf.mxu0
    %v408 = vadd.f32 %v124, %v407
    %v409 = vpop.f32.mrf.mxu0
    %v410 = vpop.f32.mrf.mxu0
    %v411 = vadd.f32 %v124, %v410
    %v412 = vpop.f32.mrf.mxu0
    %413 = vmatprep.mubr.bf16.mxu0 0
    %414 = vmatmul.mubr.bf16.gmra.mxu0 %v203
    %v415 = vpop.f32.mrf.mxu0
    %v416 = vadd.f32 %v124, %v415
    %v417 = vpop.f32.mrf.mxu0
    %v418 = vpop.f32.mrf.mxu0
    %v419 = vadd.f32 %v124, %v418
    %v420 = vpop.f32.mrf.mxu0
    %421 = vmatprep.mubr.bf16.mxu0 0
    %422 = vmatmul.mubr.bf16.gmra.mxu0 %v204
    %v423 = vpop.f32.mrf.mxu0
    %v424 = vadd.f32 %v124, %v423
    %v425 = vpop.f32.mrf.mxu0
    %v426 = vpop.f32.mrf.mxu0
    %v427 = vadd.f32 %v124, %v426
    %v428 = vpop.f32.mrf.mxu0
    %429 = vdwg.mxu0
    %v430 = vmax.f32 %v304, 0.0
    %v431 = vmax.f32 %v307, 0.0
    %v432 = vmax.f32 %v312, 0.0
    %v433 = vmax.f32 %v315, 0.0
    %v434 = vmax.f32 %v320, 0.0
    %v435 = vmax.f32 %v323, 0.0
    %v436 = vmax.f32 %v328, 0.0
    %v437 = vmax.f32 %v331, 0.0
    %v438 = vmax.f32 %v336, 0.0
    %v439 = vmax.f32 %v339, 0.0
    %v440 = vmax.f32 %v344, 0.0
    %v441 = vmax.f32 %v347, 0.0
    %v442 = vmax.f32 %v352, 0.0
    %v443 = vmax.f32 %v355, 0.0
    %v444 = vmax.f32 %v360, 0.0
    %v445 = vmax.f32 %v363, 0.0
    %v446 = vmax.f32 %v368, 0.0
    %v447 = vmax.f32 %v371, 0.0
    %v448 = vmax.f32 %v376, 0.0
    %v449 = vmax.f32 %v379, 0.0
    %v450 = vmax.f32 %v384, 0.0
    %v451 = vmax.f32 %v387, 0.0
    %v452 = vmax.f32 %v392, 0.0
    %v453 = vmax.f32 %v395, 0.0
    %v454 = vmax.f32 %v400, 0.0
    %v455 = vmax.f32 %v403, 0.0
    %v456 = vmax.f32 %v408, 0.0
    %v457 = vmax.f32 %v411, 0.0
    %v458 = vmax.f32 %v416, 0.0
    %v459 = vmax.f32 %v419, 0.0
    %v460 = vmax.f32 %v424, 0.0
    %v461 = vmax.f32 %v427, 0.0
    %v462 = vld [vmem:[#allocation7] sm:$0xf]
    %v463 = vld [vmem:[#allocation7 + $0x4] sm:$0xf]
    %v464 = vld [vmem:[#allocation7 + $0x8] sm:$0xf]
    %v465 = vld [vmem:[#allocation7 + $0xc] sm:$0xf]
    %v466 = vld [vmem:[#allocation7 + $0x10] sm:$0xf]
    %v467 = vld [vmem:[#allocation7 + $0x14] sm:$0xf]
    %v468 = vld [vmem:[#allocation7 + $0x18] sm:$0xf]
    %v469 = vld [vmem:[#allocation7 + $0x1c] sm:$0xf]
    %v470 = vld [vmem:[#allocation7 + $0x20] sm:$0xf]
    %v471 = vld [vmem:[#allocation7 + $0x24] sm:$0xf]
    %v472 = vld [vmem:[#allocation7 + $0x28] sm:$0xf]
    %v473 = vld [vmem:[#allocation7 + $0x2c] sm:$0xf]
    %v474 = vld [vmem:[#allocation7 + $0x30] sm:$0xf]
    %v475 = vld [vmem:[#allocation7 + $0x34] sm:$0xf]
    %v476 = vld [vmem:[#allocation7 + $0x38] sm:$0xf]
    %v477 = vld [vmem:[#allocation7 + $0x3c] sm:$0xf]
    %v478 = vpack.c.bf16 %v431, %v430
    %v479 = vpack.c.bf16 %v433, %v432
    %v480 = vpack.c.bf16 %v435, %v434
    %v481 = vpack.c.bf16 %v437, %v436
    %v482 = vpack.c.bf16 %v439, %v438
    %v483 = vpack.c.bf16 %v441, %v440
    %v484 = vpack.c.bf16 %v443, %v442
    %v485 = vpack.c.bf16 %v445, %v444
    %v486 = vpack.c.bf16 %v447, %v446
    %v487 = vpack.c.bf16 %v449, %v448
    %v488 = vpack.c.bf16 %v451, %v450
    %v489 = vpack.c.bf16 %v453, %v452
    %v490 = vpack.c.bf16 %v455, %v454
    %v491 = vpack.c.bf16 %v457, %v456
    %v492 = vpack.c.bf16 %v459, %v458
    %v493 = vpack.c.bf16 %v461, %v460
    %v494 = vlaneseq
    %v495 = vshrl.u32 %v494, 7
    %v496 = vsub.s32 1, %v495
    %v497 = vrot.slane %v72, %v496
    %v514 = vunpack.c.l.b16 %v462
    %v515 = vunpack.c.l.b16 %v463
    %v516 = vunpack.c.l.b16 %v464
    %v517 = vunpack.c.l.b16 %v465
    %v518 = vunpack.c.l.b16 %v466
    %v519 = vunpack.c.l.b16 %v467
    %v520 = vunpack.c.l.b16 %v468
    %v521 = vunpack.c.l.b16 %v469
    %v522 = vunpack.c.l.b16 %v470
    %v523 = vunpack.c.l.b16 %v471
    %v524 = vunpack.c.l.b16 %v472
    %v525 = vunpack.c.l.b16 %v473
    %v526 = vunpack.c.l.b16 %v474
    %v527 = vunpack.c.l.b16 %v475
    %v528 = vunpack.c.l.b16 %v476
    %v529 = vunpack.c.l.b16 %v477
    %v530 = vpack.c.b16 %v515, %v514
    %v531 = vpack.c.b16 %v517, %v516
    %v532 = vpack.c.b16 %v519, %v518
    %v533 = vpack.c.b16 %v521, %v520
    %v534 = vpack.c.b16 %v523, %v522
    %v535 = vpack.c.b16 %v525, %v524
    %v536 = vpack.c.b16 %v527, %v526
    %v537 = vpack.c.b16 %v529, %v528
    %546 = vmatprep.subr.bf16.mxu0 0
    %547 = vmatpush1.bf16.msra.mxu0 %v537
    %548 = vmatprep.subr.bf16.mxu0 0
    %549 = vmatpush1.bf16.msra.mxu0 %v536
    %550 = vmatprep.subr.bf16.mxu0 0
    %551 = vmatpush1.bf16.msra.mxu0 %v535
    %552 = vmatprep.subr.bf16.mxu0 0
    %553 = vmatpush1.bf16.msra.mxu0 %v534
    %554 = vmatprep.subr.bf16.mxu0 0
    %555 = vmatpush1.bf16.msra.mxu0 %v533
    %556 = vmatprep.subr.bf16.mxu0 0
    %557 = vmatpush1.bf16.msra.mxu0 %v532
    %558 = vmatprep.subr.bf16.mxu0 0
    %559 = vmatpush1.bf16.msra.mxu0 %v531
    %560 = vmatprep.subr.bf16.mxu0 0
    %561 = vmatpush1.bf16.msra.mxu0 %v530
    %562 = vmatprep.subr.bf16.mxu0 0
    %563 = vmatpush2.bf16.msra.mxu0 0
    %564 = vmatprep.subr.bf16.mxu0 0
    %565 = vmatpush2.bf16.msra.mxu0 0
    %566 = vmatprep.subr.bf16.mxu0 0
    %567 = vmatpush2.bf16.msra.mxu0 0
    %568 = vmatprep.subr.bf16.mxu0 0
    %569 = vmatpush2.bf16.msra.mxu0 0
    %570 = vmatprep.subr.bf16.mxu0 0
    %571 = vmatpush2.bf16.msra.mxu0 0
    %572 = vmatprep.subr.bf16.mxu0 0
    %573 = vmatpush2.bf16.msra.mxu0 0
    %574 = vmatprep.subr.bf16.mxu0 0
    %575 = vmatpush2.bf16.msra.mxu0 0
    %576 = vmatprep.subr.bf16.mxu0 0
    %577 = vmatpush2.bf16.msra.mxu0 0
    %578 = vmatprep.mubr.bf16.mxu0 0
    %579 = vmatmul.mubr.bf16.gmra.mxu0 %v478
    %v580 = vpop.f32.mrf.mxu0
    %v581 = vadd.f32 %v497, %v580
    %v582 = vpop.f32.mrf.mxu0
    %v583 = vpop.f32.mrf.mxu0
    %v584 = vadd.f32 %v497, %v583
    %v585 = vpop.f32.mrf.mxu0
    %586 = vmatprep.mubr.bf16.mxu0 0
    %587 = vmatmul.mubr.bf16.gmra.mxu0 %v479
    %v588 = vpop.f32.mrf.mxu0
    %v589 = vadd.f32 %v497, %v588
    %v590 = vpop.f32.mrf.mxu0
    %v591 = vpop.f32.mrf.mxu0
    %v592 = vadd.f32 %v497, %v591
    %v593 = vpop.f32.mrf.mxu0
    %594 = vmatprep.mubr.bf16.mxu0 0
    %595 = vmatmul.mubr.bf16.gmra.mxu0 %v480
    %v596 = vpop.f32.mrf.mxu0
    %v597 = vadd.f32 %v497, %v596
    %v598 = vpop.f32.mrf.mxu0
    %v599 = vpop.f32.mrf.mxu0
    %v600 = vadd.f32 %v497, %v599
    %v601 = vpop.f32.mrf.mxu0
    %602 = vmatprep.mubr.bf16.mxu0 0
    %603 = vmatmul.mubr.bf16.gmra.mxu0 %v481
    %v604 = vpop.f32.mrf.mxu0
    %v605 = vadd.f32 %v497, %v604
    %v606 = vpop.f32.mrf.mxu0
    %v607 = vpop.f32.mrf.mxu0
    %v608 = vadd.f32 %v497, %v607
    %v609 = vpop.f32.mrf.mxu0
    %610 = vmatprep.mubr.bf16.mxu0 0
    %611 = vmatmul.mubr.bf16.gmra.mxu0 %v482
    %v612 = vpop.f32.mrf.mxu0
    %v613 = vadd.f32 %v497, %v612
    %v614 = vpop.f32.mrf.mxu0
    %v615 = vpop.f32.mrf.mxu0
    %v616 = vadd.f32 %v497, %v615
    %v617 = vpop.f32.mrf.mxu0
    %618 = vmatprep.mubr.bf16.mxu0 0
    %619 = vmatmul.mubr.bf16.gmra.mxu0 %v483
    %v620 = vpop.f32.mrf.mxu0
    %v621 = vadd.f32 %v497, %v620
    %v622 = vpop.f32.mrf.mxu0
    %v623 = vpop.f32.mrf.mxu0
    %v624 = vadd.f32 %v497, %v623
    %v625 = vpop.f32.mrf.mxu0
    %626 = vmatprep.mubr.bf16.mxu0 0
    %627 = vmatmul.mubr.bf16.gmra.mxu0 %v484
    %v628 = vpop.f32.mrf.mxu0
    %v629 = vadd.f32 %v497, %v628
    %v630 = vpop.f32.mrf.mxu0
    %v631 = vpop.f32.mrf.mxu0
    %v632 = vadd.f32 %v497, %v631
    %v633 = vpop.f32.mrf.mxu0
    %634 = vmatprep.mubr.bf16.mxu0 0
    %635 = vmatmul.mubr.bf16.gmra.mxu0 %v485
    %v636 = vpop.f32.mrf.mxu0
    %v637 = vadd.f32 %v497, %v636
    %v638 = vpop.f32.mrf.mxu0
    %v639 = vpop.f32.mrf.mxu0
    %v640 = vadd.f32 %v497, %v639
    %v641 = vpop.f32.mrf.mxu0
    %642 = vmatprep.mubr.bf16.mxu0 0
    %643 = vmatmul.mubr.bf16.gmra.mxu0 %v486
    %v644 = vpop.f32.mrf.mxu0
    %v645 = vadd.f32 %v497, %v644
    %v646 = vpop.f32.mrf.mxu0
    %v647 = vpop.f32.mrf.mxu0
    %v648 = vadd.f32 %v497, %v647
    %v649 = vpop.f32.mrf.mxu0
    %650 = vmatprep.mubr.bf16.mxu0 0
    %651 = vmatmul.mubr.bf16.gmra.mxu0 %v487
    %v652 = vpop.f32.mrf.mxu0
    %v653 = vadd.f32 %v497, %v652
    %v654 = vpop.f32.mrf.mxu0
    %v655 = vpop.f32.mrf.mxu0
    %v656 = vadd.f32 %v497, %v655
    %v657 = vpop.f32.mrf.mxu0
    %658 = vmatprep.mubr.bf16.mxu0 0
    %659 = vmatmul.mubr.bf16.gmra.mxu0 %v488
    %v660 = vpop.f32.mrf.mxu0
    %v661 = vadd.f32 %v497, %v660
    %v662 = vpop.f32.mrf.mxu0
    %v663 = vpop.f32.mrf.mxu0
    %v664 = vadd.f32 %v497, %v663
    %v665 = vpop.f32.mrf.mxu0
    %666 = vmatprep.mubr.bf16.mxu0 0
    %667 = vmatmul.mubr.bf16.gmra.mxu0 %v489
    %v668 = vpop.f32.mrf.mxu0
    %v669 = vadd.f32 %v497, %v668
    %v670 = vpop.f32.mrf.mxu0
    %v671 = vpop.f32.mrf.mxu0
    %v672 = vadd.f32 %v497, %v671
    %v673 = vpop.f32.mrf.mxu0
    %674 = vmatprep.mubr.bf16.mxu0 0
    %675 = vmatmul.mubr.bf16.gmra.mxu0 %v490
    %v676 = vpop.f32.mrf.mxu0
    %v677 = vadd.f32 %v497, %v676
    %v678 = vpop.f32.mrf.mxu0
    %v679 = vpop.f32.mrf.mxu0
    %v680 = vadd.f32 %v497, %v679
    %v681 = vpop.f32.mrf.mxu0
    %682 = vmatprep.mubr.bf16.mxu0 0
    %683 = vmatmul.mubr.bf16.gmra.mxu0 %v491
    %v684 = vpop.f32.mrf.mxu0
    %v685 = vadd.f32 %v497, %v684
    %v686 = vpop.f32.mrf.mxu0
    %v687 = vpop.f32.mrf.mxu0
    %v688 = vadd.f32 %v497, %v687
    %v689 = vpop.f32.mrf.mxu0
    %690 = vmatprep.mubr.bf16.mxu0 0
    %691 = vmatmul.mubr.bf16.gmra.mxu0 %v492
    %v692 = vpop.f32.mrf.mxu0
    %v693 = vadd.f32 %v497, %v692
    %v694 = vpop.f32.mrf.mxu0
    %v695 = vpop.f32.mrf.mxu0
    %v696 = vadd.f32 %v497, %v695
    %v697 = vpop.f32.mrf.mxu0
    %698 = vmatprep.mubr.bf16.mxu0 0
    %699 = vmatmul.mubr.bf16.gmra.mxu0 %v493
    %v700 = vpop.f32.mrf.mxu0
    %v701 = vadd.f32 %v497, %v700
    %v702 = vpop.f32.mrf.mxu0
    %v703 = vpop.f32.mrf.mxu0
    %v704 = vadd.f32 %v497, %v703
    %v705 = vpop.f32.mrf.mxu0
    %706 = vdwg.mxu0
    %v707 = vmax.f32 %v581, 0.0
    %v708 = vmax.f32 %v584, 0.0
    %v709 = vmax.f32 %v589, 0.0
    %v710 = vmax.f32 %v592, 0.0
    %v711 = vmax.f32 %v597, 0.0
    %v712 = vmax.f32 %v600, 0.0
    %v713 = vmax.f32 %v605, 0.0
    %v714 = vmax.f32 %v608, 0.0
    %v715 = vmax.f32 %v613, 0.0
    %v716 = vmax.f32 %v616, 0.0
    %v717 = vmax.f32 %v621, 0.0
    %v718 = vmax.f32 %v624, 0.0
    %v719 = vmax.f32 %v629, 0.0
    %v720 = vmax.f32 %v632, 0.0
    %v721 = vmax.f32 %v637, 0.0
    %v722 = vmax.f32 %v640, 0.0
    %v723 = vmax.f32 %v645, 0.0
    %v724 = vmax.f32 %v648, 0.0
    %v725 = vmax.f32 %v653, 0.0
    %v726 = vmax.f32 %v656, 0.0
    %v727 = vmax.f32 %v661, 0.0
    %v728 = vmax.f32 %v664, 0.0
    %v729 = vmax.f32 %v669, 0.0
    %v730 = vmax.f32 %v672, 0.0
    %v731 = vmax.f32 %v677, 0.0
    %v732 = vmax.f32 %v680, 0.0
    %v733 = vmax.f32 %v685, 0.0
    %v734 = vmax.f32 %v688, 0.0
    %v735 = vmax.f32 %v693, 0.0
    %v736 = vmax.f32 %v696, 0.0
    %v737 = vmax.f32 %v701, 0.0
    %v738 = vmax.f32 %v704, 0.0
    %s739 = scalar_lea.vmem [#allocation7], 64
    %v740 = vld [vmem:[%s739] sm:$0xf]
    %v741 = vld [vmem:[%s739 + $0x4] sm:$0xf]
    %v742 = vld [vmem:[%s739 + $0x8] sm:$0xf]
    %v743 = vld [vmem:[%s739 + $0xc] sm:$0xf]
    %v744 = vld [vmem:[%s739 + $0x10] sm:$0xf]
    %v745 = vld [vmem:[%s739 + $0x14] sm:$0xf]
    %v746 = vld [vmem:[%s739 + $0x18] sm:$0xf]
    %v747 = vld [vmem:[%s739 + $0x1c] sm:$0xf]
    %v748 = vld [vmem:[%s739 + $0x20] sm:$0xf]
    %v749 = vld [vmem:[%s739 + $0x24] sm:$0xf]
    %v750 = vld [vmem:[%s739 + $0x28] sm:$0xf]
    %v751 = vld [vmem:[%s739 + $0x2c] sm:$0xf]
    %v752 = vld [vmem:[%s739 + $0x30] sm:$0xf]
    %v753 = vld [vmem:[%s739 + $0x34] sm:$0xf]
    %v754 = vld [vmem:[%s739 + $0x38] sm:$0xf]
    %v755 = vld [vmem:[%s739 + $0x3c] sm:$0xf]
    %v756 = vpack.c.bf16 %v708, %v707
    %v757 = vpack.c.bf16 %v710, %v709
    %v758 = vpack.c.bf16 %v712, %v711
    %v759 = vpack.c.bf16 %v714, %v713
    %v760 = vpack.c.bf16 %v716, %v715
    %v761 = vpack.c.bf16 %v718, %v717
    %v762 = vpack.c.bf16 %v720, %v719
    %v763 = vpack.c.bf16 %v722, %v721
    %v764 = vpack.c.bf16 %v724, %v723
    %v765 = vpack.c.bf16 %v726, %v725
    %v766 = vpack.c.bf16 %v728, %v727
    %v767 = vpack.c.bf16 %v730, %v729
    %v768 = vpack.c.bf16 %v732, %v731
    %v769 = vpack.c.bf16 %v734, %v733
    %v770 = vpack.c.bf16 %v736, %v735
    %v771 = vpack.c.bf16 %v738, %v737
    %v772 = vlaneseq
    %v773 = vshrl.u32 %v772, 7
    %v774 = vsub.s32 2, %v773
    %v775 = vrot.slane %v72, %v774
    %v792 = vunpack.c.l.b16 %v740
    %v793 = vunpack.c.l.b16 %v741
    %v794 = vunpack.c.l.b16 %v742
    %v795 = vunpack.c.l.b16 %v743
    %v796 = vunpack.c.l.b16 %v744
    %v797 = vunpack.c.l.b16 %v745
    %v798 = vunpack.c.l.b16 %v746
    %v799 = vunpack.c.l.b16 %v747
    %v800 = vunpack.c.l.b16 %v748
    %v801 = vunpack.c.l.b16 %v749
    %v802 = vunpack.c.l.b16 %v750
    %v803 = vunpack.c.l.b16 %v751
    %v804 = vunpack.c.l.b16 %v752
    %v805 = vunpack.c.l.b16 %v753
    %v806 = vunpack.c.l.b16 %v754
    %v807 = vunpack.c.l.b16 %v755
    %v808 = vpack.c.b16 %v793, %v792
    %v809 = vpack.c.b16 %v795, %v794
    %v810 = vpack.c.b16 %v797, %v796
    %v811 = vpack.c.b16 %v799, %v798
    %v812 = vpack.c.b16 %v801, %v800
    %v813 = vpack.c.b16 %v803, %v802
    %v814 = vpack.c.b16 %v805, %v804
    %v815 = vpack.c.b16 %v807, %v806
    %824 = vmatprep.subr.bf16.mxu0 0
    %825 = vmatpush1.bf16.msra.mxu0 %v815
    %826 = vmatprep.subr.bf16.mxu0 0
    %827 = vmatpush1.bf16.msra.mxu0 %v814
    %828 = vmatprep.subr.bf16.mxu0 0
    %829 = vmatpush1.bf16.msra.mxu0 %v813
    %830 = vmatprep.subr.bf16.mxu0 0
    %831 = vmatpush1.bf16.msra.mxu0 %v812
    %832 = vmatprep.subr.bf16.mxu0 0
    %833 = vmatpush1.bf16.msra.mxu0 %v811
    %834 = vmatprep.subr.bf16.mxu0 0
    %835 = vmatpush1.bf16.msra.mxu0 %v810
    %836 = vmatprep.subr.bf16.mxu0 0
    %837 = vmatpush1.bf16.msra.mxu0 %v809
    %838 = vmatprep.subr.bf16.mxu0 0
    %839 = vmatpush1.bf16.msra.mxu0 %v808
    %840 = vmatprep.subr.bf16.mxu0 0
    %841 = vmatpush2.bf16.msra.mxu0 0
    %842 = vmatprep.subr.bf16.mxu0 0
    %843 = vmatpush2.bf16.msra.mxu0 0
    %844 = vmatprep.subr.bf16.mxu0 0
    %845 = vmatpush2.bf16.msra.mxu0 0
    %846 = vmatprep.subr.bf16.mxu0 0
    %847 = vmatpush2.bf16.msra.mxu0 0
    %848 = vmatprep.subr.bf16.mxu0 0
    %849 = vmatpush2.bf16.msra.mxu0 0
    %850 = vmatprep.subr.bf16.mxu0 0
    %851 = vmatpush2.bf16.msra.mxu0 0
    %852 = vmatprep.subr.bf16.mxu0 0
    %853 = vmatpush2.bf16.msra.mxu0 0
    %854 = vmatprep.subr.bf16.mxu0 0
    %855 = vmatpush2.bf16.msra.mxu0 0
    %856 = vmatprep.mubr.bf16.mxu0 0
    %857 = vmatmul.mubr.bf16.gmra.mxu0 %v756
    %v858 = vpop.f32.mrf.mxu0
    %v859 = vadd.f32 %v775, %v858
    %v860 = vpop.f32.mrf.mxu0
    %v861 = vpop.f32.mrf.mxu0
    %v862 = vadd.f32 %v775, %v861
    %v863 = vpop.f32.mrf.mxu0
    %864 = vmatprep.mubr.bf16.mxu0 0
    %865 = vmatmul.mubr.bf16.gmra.mxu0 %v757
    %v866 = vpop.f32.mrf.mxu0
    %v867 = vadd.f32 %v775, %v866
    %v868 = vpop.f32.mrf.mxu0
    %v869 = vpop.f32.mrf.mxu0
    %v870 = vadd.f32 %v775, %v869
    %v871 = vpop.f32.mrf.mxu0
    %872 = vmatprep.mubr.bf16.mxu0 0
    %873 = vmatmul.mubr.bf16.gmra.mxu0 %v758
    %v874 = vpop.f32.mrf.mxu0
    %v875 = vadd.f32 %v775, %v874
    %v876 = vpop.f32.mrf.mxu0
    %v877 = vpop.f32.mrf.mxu0
    %v878 = vadd.f32 %v775, %v877
    %v879 = vpop.f32.mrf.mxu0
    %880 = vmatprep.mubr.bf16.mxu0 0
    %881 = vmatmul.mubr.bf16.gmra.mxu0 %v759
    %v882 = vpop.f32.mrf.mxu0
    %v883 = vadd.f32 %v775, %v882
    %v884 = vpop.f32.mrf.mxu0
    %v885 = vpop.f32.mrf.mxu0
    %v886 = vadd.f32 %v775, %v885
    %v887 = vpop.f32.mrf.mxu0
    %888 = vmatprep.mubr.bf16.mxu0 0
    %889 = vmatmul.mubr.bf16.gmra.mxu0 %v760
    %v890 = vpop.f32.mrf.mxu0
    %v891 = vadd.f32 %v775, %v890
    %v892 = vpop.f32.mrf.mxu0
    %v893 = vpop.f32.mrf.mxu0
    %v894 = vadd.f32 %v775, %v893
    %v895 = vpop.f32.mrf.mxu0
    %896 = vmatprep.mubr.bf16.mxu0 0
    %897 = vmatmul.mubr.bf16.gmra.mxu0 %v761
    %v898 = vpop.f32.mrf.mxu0
    %v899 = vadd.f32 %v775, %v898
    %v900 = vpop.f32.mrf.mxu0
    %v901 = vpop.f32.mrf.mxu0
    %v902 = vadd.f32 %v775, %v901
    %v903 = vpop.f32.mrf.mxu0
    %904 = vmatprep.mubr.bf16.mxu0 0
    %905 = vmatmul.mubr.bf16.gmra.mxu0 %v762
    %v906 = vpop.f32.mrf.mxu0
    %v907 = vadd.f32 %v775, %v906
    %v908 = vpop.f32.mrf.mxu0
    %v909 = vpop.f32.mrf.mxu0
    %v910 = vadd.f32 %v775, %v909
    %v911 = vpop.f32.mrf.mxu0
    %912 = vmatprep.mubr.bf16.mxu0 0
    %913 = vmatmul.mubr.bf16.gmra.mxu0 %v763
    %v914 = vpop.f32.mrf.mxu0
    %v915 = vadd.f32 %v775, %v914
    %v916 = vpop.f32.mrf.mxu0
    %v917 = vpop.f32.mrf.mxu0
    %v918 = vadd.f32 %v775, %v917
    %v919 = vpop.f32.mrf.mxu0
    %920 = vmatprep.mubr.bf16.mxu0 0
    %921 = vmatmul.mubr.bf16.gmra.mxu0 %v764
    %v922 = vpop.f32.mrf.mxu0
    %v923 = vadd.f32 %v775, %v922
    %v924 = vpop.f32.mrf.mxu0
    %v925 = vpop.f32.mrf.mxu0
    %v926 = vadd.f32 %v775, %v925
    %v927 = vpop.f32.mrf.mxu0
    %928 = vmatprep.mubr.bf16.mxu0 0
    %929 = vmatmul.mubr.bf16.gmra.mxu0 %v765
    %v930 = vpop.f32.mrf.mxu0
    %v931 = vadd.f32 %v775, %v930
    %v932 = vpop.f32.mrf.mxu0
    %v933 = vpop.f32.mrf.mxu0
    %v934 = vadd.f32 %v775, %v933
    %v935 = vpop.f32.mrf.mxu0
    %936 = vmatprep.mubr.bf16.mxu0 0
    %937 = vmatmul.mubr.bf16.gmra.mxu0 %v766
    %v938 = vpop.f32.mrf.mxu0
    %v939 = vadd.f32 %v775, %v938
    %v940 = vpop.f32.mrf.mxu0
    %v941 = vpop.f32.mrf.mxu0
    %v942 = vadd.f32 %v775, %v941
    %v943 = vpop.f32.mrf.mxu0
    %944 = vmatprep.mubr.bf16.mxu0 0
    %945 = vmatmul.mubr.bf16.gmra.mxu0 %v767
    %v946 = vpop.f32.mrf.mxu0
    %v947 = vadd.f32 %v775, %v946
    %v948 = vpop.f32.mrf.mxu0
    %v949 = vpop.f32.mrf.mxu0
    %v950 = vadd.f32 %v775, %v949
    %v951 = vpop.f32.mrf.mxu0
    %952 = vmatprep.mubr.bf16.mxu0 0
    %953 = vmatmul.mubr.bf16.gmra.mxu0 %v768
    %v954 = vpop.f32.mrf.mxu0
    %v955 = vadd.f32 %v775, %v954
    %v956 = vpop.f32.mrf.mxu0
    %v957 = vpop.f32.mrf.mxu0
    %v958 = vadd.f32 %v775, %v957
    %v959 = vpop.f32.mrf.mxu0
    %960 = vmatprep.mubr.bf16.mxu0 0
    %961 = vmatmul.mubr.bf16.gmra.mxu0 %v769
    %v962 = vpop.f32.mrf.mxu0
    %v963 = vadd.f32 %v775, %v962
    %v964 = vpop.f32.mrf.mxu0
    %v965 = vpop.f32.mrf.mxu0
    %v966 = vadd.f32 %v775, %v965
    %v967 = vpop.f32.mrf.mxu0
    %968 = vmatprep.mubr.bf16.mxu0 0
    %969 = vmatmul.mubr.bf16.gmra.mxu0 %v770
    %v970 = vpop.f32.mrf.mxu0
    %v971 = vadd.f32 %v775, %v970
    %v972 = vpop.f32.mrf.mxu0
    %v973 = vpop.f32.mrf.mxu0
    %v974 = vadd.f32 %v775, %v973
    %v975 = vpop.f32.mrf.mxu0
    %976 = vmatprep.mubr.bf16.mxu0 0
    %977 = vmatmul.mubr.bf16.gmra.mxu0 %v771
    %v978 = vpop.f32.mrf.mxu0
    %v979 = vadd.f32 %v775, %v978
    %v980 = vpop.f32.mrf.mxu0
    %v981 = vpop.f32.mrf.mxu0
    %v982 = vadd.f32 %v775, %v981
    %v983 = vpop.f32.mrf.mxu0
    %984 = vdwg.mxu0
    %v985 = vmax.f32 %v859, 0.0
    %v986 = vmax.f32 %v862, 0.0
    %v987 = vmax.f32 %v867, 0.0
    %v988 = vmax.f32 %v870, 0.0
    %v989 = vmax.f32 %v875, 0.0
    %v990 = vmax.f32 %v878, 0.0
    %v991 = vmax.f32 %v883, 0.0
    %v992 = vmax.f32 %v886, 0.0
    %v993 = vmax.f32 %v891, 0.0
    %v994 = vmax.f32 %v894, 0.0
    %v995 = vmax.f32 %v899, 0.0
    %v996 = vmax.f32 %v902, 0.0
    %v997 = vmax.f32 %v907, 0.0
    %v998 = vmax.f32 %v910, 0.0
    %v999 = vmax.f32 %v915, 0.0
    %v1000 = vmax.f32 %v918, 0.0
    %v1001 = vmax.f32 %v923, 0.0
    %v1002 = vmax.f32 %v926, 0.0
    %v1003 = vmax.f32 %v931, 0.0
    %v1004 = vmax.f32 %v934, 0.0
    %v1005 = vmax.f32 %v939, 0.0
    %v1006 = vmax.f32 %v942, 0.0
    %v1007 = vmax.f32 %v947, 0.0
    %v1008 = vmax.f32 %v950, 0.0
    %v1009 = vmax.f32 %v955, 0.0
    %v1010 = vmax.f32 %v958, 0.0
    %v1011 = vmax.f32 %v963, 0.0
    %v1012 = vmax.f32 %v966, 0.0
    %v1013 = vmax.f32 %v971, 0.0
    %v1014 = vmax.f32 %v974, 0.0
    %v1015 = vmax.f32 %v979, 0.0
    %v1016 = vmax.f32 %v982, 0.0
    %s1017 = scalar_lea.vmem [#allocation7], 128
    %v1018 = vld [vmem:[%s1017] sm:$0xf]
    %v1019 = vld [vmem:[%s1017 + $0x4] sm:$0xf]
    %v1020 = vld [vmem:[%s1017 + $0x8] sm:$0xf]
    %v1021 = vld [vmem:[%s1017 + $0xc] sm:$0xf]
    %v1022 = vld [vmem:[%s1017 + $0x10] sm:$0xf]
    %v1023 = vld [vmem:[%s1017 + $0x14] sm:$0xf]
    %v1024 = vld [vmem:[%s1017 + $0x18] sm:$0xf]
    %v1025 = vld [vmem:[%s1017 + $0x1c] sm:$0xf]
    %v1026 = vld [vmem:[%s1017 + $0x20] sm:$0xf]
    %v1027 = vld [vmem:[%s1017 + $0x24] sm:$0xf]
    %v1028 = vld [vmem:[%s1017 + $0x28] sm:$0xf]
    %v1029 = vld [vmem:[%s1017 + $0x2c] sm:$0xf]
    %v1030 = vld [vmem:[%s1017 + $0x30] sm:$0xf]
    %v1031 = vld [vmem:[%s1017 + $0x34] sm:$0xf]
    %v1032 = vld [vmem:[%s1017 + $0x38] sm:$0xf]
    %v1033 = vld [vmem:[%s1017 + $0x3c] sm:$0xf]
    %v1034 = vpack.c.bf16 %v986, %v985
    %v1035 = vpack.c.bf16 %v988, %v987
    %v1036 = vpack.c.bf16 %v990, %v989
    %v1037 = vpack.c.bf16 %v992, %v991
    %v1038 = vpack.c.bf16 %v994, %v993
    %v1039 = vpack.c.bf16 %v996, %v995
    %v1040 = vpack.c.bf16 %v998, %v997
    %v1041 = vpack.c.bf16 %v1000, %v999
    %v1042 = vpack.c.bf16 %v1002, %v1001
    %v1043 = vpack.c.bf16 %v1004, %v1003
    %v1044 = vpack.c.bf16 %v1006, %v1005
    %v1045 = vpack.c.bf16 %v1008, %v1007
    %v1046 = vpack.c.bf16 %v1010, %v1009
    %v1047 = vpack.c.bf16 %v1012, %v1011
    %v1048 = vpack.c.bf16 %v1014, %v1013
    %v1049 = vpack.c.bf16 %v1016, %v1015
    %v1050 = vlaneseq
    %v1051 = vshrl.u32 %v1050, 7
    %v1052 = vsub.s32 3, %v1051
    %v1053 = vrot.slane %v72, %v1052
    %v1070 = vunpack.c.l.b16 %v1018
    %v1071 = vunpack.c.l.b16 %v1019
    %v1072 = vunpack.c.l.b16 %v1020
    %v1073 = vunpack.c.l.b16 %v1021
    %v1074 = vunpack.c.l.b16 %v1022
    %v1075 = vunpack.c.l.b16 %v1023
    %v1076 = vunpack.c.l.b16 %v1024
    %v1077 = vunpack.c.l.b16 %v1025
    %v1078 = vunpack.c.l.b16 %v1026
    %v1079 = vunpack.c.l.b16 %v1027
    %v1080 = vunpack.c.l.b16 %v1028
    %v1081 = vunpack.c.l.b16 %v1029
    %v1082 = vunpack.c.l.b16 %v1030
    %v1083 = vunpack.c.l.b16 %v1031
    %v1084 = vunpack.c.l.b16 %v1032
    %v1085 = vunpack.c.l.b16 %v1033
    %v1086 = vpack.c.b16 %v1071, %v1070
    %v1087 = vpack.c.b16 %v1073, %v1072
    %v1088 = vpack.c.b16 %v1075, %v1074
    %v1089 = vpack.c.b16 %v1077, %v1076
    %v1090 = vpack.c.b16 %v1079, %v1078
    %v1091 = vpack.c.b16 %v1081, %v1080
    %v1092 = vpack.c.b16 %v1083, %v1082
    %v1093 = vpack.c.b16 %v1085, %v1084
    %1102 = vmatprep.subr.bf16.mxu0 0
    %1103 = vmatpush1.bf16.msra.mxu0 %v1093
    %1104 = vmatprep.subr.bf16.mxu0 0
    %1105 = vmatpush1.bf16.msra.mxu0 %v1092
    %1106 = vmatprep.subr.bf16.mxu0 0
    %1107 = vmatpush1.bf16.msra.mxu0 %v1091
    %1108 = vmatprep.subr.bf16.mxu0 0
    %1109 = vmatpush1.bf16.msra.mxu0 %v1090
    %1110 = vmatprep.subr.bf16.mxu0 0
    %1111 = vmatpush1.bf16.msra.mxu0 %v1089
    %1112 = vmatprep.subr.bf16.mxu0 0
    %1113 = vmatpush1.bf16.msra.mxu0 %v1088
    %1114 = vmatprep.subr.bf16.mxu0 0
    %1115 = vmatpush1.bf16.msra.mxu0 %v1087
    %1116 = vmatprep.subr.bf16.mxu0 0
    %1117 = vmatpush1.bf16.msra.mxu0 %v1086
    %1118 = vmatprep.subr.bf16.mxu0 0
    %1119 = vmatpush2.bf16.msra.mxu0 0
    %1120 = vmatprep.subr.bf16.mxu0 0
    %1121 = vmatpush2.bf16.msra.mxu0 0
    %1122 = vmatprep.subr.bf16.mxu0 0
    %1123 = vmatpush2.bf16.msra.mxu0 0
    %1124 = vmatprep.subr.bf16.mxu0 0
    %1125 = vmatpush2.bf16.msra.mxu0 0
    %1126 = vmatprep.subr.bf16.mxu0 0
    %1127 = vmatpush2.bf16.msra.mxu0 0
    %1128 = vmatprep.subr.bf16.mxu0 0
    %1129 = vmatpush2.bf16.msra.mxu0 0
    %1130 = vmatprep.subr.bf16.mxu0 0
    %1131 = vmatpush2.bf16.msra.mxu0 0
    %1132 = vmatprep.subr.bf16.mxu0 0
    %1133 = vmatpush2.bf16.msra.mxu0 0
    %1134 = vmatprep.mubr.bf16.mxu0 0
    %1135 = vmatmul.mubr.bf16.gmra.mxu0 %v1034
    %v1136 = vpop.f32.mrf.mxu0
    %v1137 = vadd.f32 %v1053, %v1136
    %v1138 = vpop.f32.mrf.mxu0
    %v1139 = vpop.f32.mrf.mxu0
    %v1140 = vadd.f32 %v1053, %v1139
    %v1141 = vpop.f32.mrf.mxu0
    %1142 = vmatprep.mubr.bf16.mxu0 0
    %1143 = vmatmul.mubr.bf16.gmra.mxu0 %v1035
    %v1144 = vpop.f32.mrf.mxu0
    %v1145 = vadd.f32 %v1053, %v1144
    %v1146 = vpop.f32.mrf.mxu0
    %v1147 = vpop.f32.mrf.mxu0
    %v1148 = vadd.f32 %v1053, %v1147
    %v1149 = vpop.f32.mrf.mxu0
    %1150 = vmatprep.mubr.bf16.mxu0 0
    %1151 = vmatmul.mubr.bf16.gmra.mxu0 %v1036
    %v1152 = vpop.f32.mrf.mxu0
    %v1153 = vadd.f32 %v1053, %v1152
    %v1154 = vpop.f32.mrf.mxu0
    %v1155 = vpop.f32.mrf.mxu0
    %v1156 = vadd.f32 %v1053, %v1155
    %v1157 = vpop.f32.mrf.mxu0
    %1158 = vmatprep.mubr.bf16.mxu0 0
    %1159 = vmatmul.mubr.bf16.gmra.mxu0 %v1037
    %v1160 = vpop.f32.mrf.mxu0
    %v1161 = vadd.f32 %v1053, %v1160
    %v1162 = vpop.f32.mrf.mxu0
    %v1163 = vpop.f32.mrf.mxu0
    %v1164 = vadd.f32 %v1053, %v1163
    %v1165 = vpop.f32.mrf.mxu0
    %1166 = vmatprep.mubr.bf16.mxu0 0
    %1167 = vmatmul.mubr.bf16.gmra.mxu0 %v1038
    %v1168 = vpop.f32.mrf.mxu0
    %v1169 = vadd.f32 %v1053, %v1168
    %v1170 = vpop.f32.mrf.mxu0
    %v1171 = vpop.f32.mrf.mxu0
    %v1172 = vadd.f32 %v1053, %v1171
    %v1173 = vpop.f32.mrf.mxu0
    %1174 = vmatprep.mubr.bf16.mxu0 0
    %1175 = vmatmul.mubr.bf16.gmra.mxu0 %v1039
    %v1176 = vpop.f32.mrf.mxu0
    %v1177 = vadd.f32 %v1053, %v1176
    %v1178 = vpop.f32.mrf.mxu0
    %v1179 = vpop.f32.mrf.mxu0
    %v1180 = vadd.f32 %v1053, %v1179
    %v1181 = vpop.f32.mrf.mxu0
    %1182 = vmatprep.mubr.bf16.mxu0 0
    %1183 = vmatmul.mubr.bf16.gmra.mxu0 %v1040
    %v1184 = vpop.f32.mrf.mxu0
    %v1185 = vadd.f32 %v1053, %v1184
    %v1186 = vpop.f32.mrf.mxu0
    %v1187 = vpop.f32.mrf.mxu0
    %v1188 = vadd.f32 %v1053, %v1187
    %v1189 = vpop.f32.mrf.mxu0
    %1190 = vmatprep.mubr.bf16.mxu0 0
    %1191 = vmatmul.mubr.bf16.gmra.mxu0 %v1041
    %v1192 = vpop.f32.mrf.mxu0
    %v1193 = vadd.f32 %v1053, %v1192
    %v1194 = vpop.f32.mrf.mxu0
    %v1195 = vpop.f32.mrf.mxu0
    %v1196 = vadd.f32 %v1053, %v1195
    %v1197 = vpop.f32.mrf.mxu0
    %1198 = vmatprep.mubr.bf16.mxu0 0
    %1199 = vmatmul.mubr.bf16.gmra.mxu0 %v1042
    %v1200 = vpop.f32.mrf.mxu0
    %v1201 = vadd.f32 %v1053, %v1200
    %v1202 = vpop.f32.mrf.mxu0
    %v1203 = vpop.f32.mrf.mxu0
    %v1204 = vadd.f32 %v1053, %v1203
    %v1205 = vpop.f32.mrf.mxu0
    %1206 = vmatprep.mubr.bf16.mxu0 0
    %1207 = vmatmul.mubr.bf16.gmra.mxu0 %v1043
    %v1208 = vpop.f32.mrf.mxu0
    %v1209 = vadd.f32 %v1053, %v1208
    %v1210 = vpop.f32.mrf.mxu0
    %v1211 = vpop.f32.mrf.mxu0
    %v1212 = vadd.f32 %v1053, %v1211
    %v1213 = vpop.f32.mrf.mxu0
    %1214 = vmatprep.mubr.bf16.mxu0 0
    %1215 = vmatmul.mubr.bf16.gmra.mxu0 %v1044
    %v1216 = vpop.f32.mrf.mxu0
    %v1217 = vadd.f32 %v1053, %v1216
    %v1218 = vpop.f32.mrf.mxu0
    %v1219 = vpop.f32.mrf.mxu0
    %v1220 = vadd.f32 %v1053, %v1219
    %v1221 = vpop.f32.mrf.mxu0
    %1222 = vmatprep.mubr.bf16.mxu0 0
    %1223 = vmatmul.mubr.bf16.gmra.mxu0 %v1045
    %v1224 = vpop.f32.mrf.mxu0
    %v1225 = vadd.f32 %v1053, %v1224
    %v1226 = vpop.f32.mrf.mxu0
    %v1227 = vpop.f32.mrf.mxu0
    %v1228 = vadd.f32 %v1053, %v1227
    %v1229 = vpop.f32.mrf.mxu0
    %1230 = vmatprep.mubr.bf16.mxu0 0
    %1231 = vmatmul.mubr.bf16.gmra.mxu0 %v1046
    %v1232 = vpop.f32.mrf.mxu0
    %v1233 = vadd.f32 %v1053, %v1232
    %v1234 = vpop.f32.mrf.mxu0
    %v1235 = vpop.f32.mrf.mxu0
    %v1236 = vadd.f32 %v1053, %v1235
    %v1237 = vpop.f32.mrf.mxu0
    %1238 = vmatprep.mubr.bf16.mxu0 0
    %1239 = vmatmul.mubr.bf16.gmra.mxu0 %v1047
    %v1240 = vpop.f32.mrf.mxu0
    %v1241 = vadd.f32 %v1053, %v1240
    %v1242 = vpop.f32.mrf.mxu0
    %v1243 = vpop.f32.mrf.mxu0
    %v1244 = vadd.f32 %v1053, %v1243
    %v1245 = vpop.f32.mrf.mxu0
    %1246 = vmatprep.mubr.bf16.mxu0 0
    %1247 = vmatmul.mubr.bf16.gmra.mxu0 %v1048
    %v1248 = vpop.f32.mrf.mxu0
    %v1249 = vadd.f32 %v1053, %v1248
    %v1250 = vpop.f32.mrf.mxu0
    %v1251 = vpop.f32.mrf.mxu0
    %v1252 = vadd.f32 %v1053, %v1251
    %v1253 = vpop.f32.mrf.mxu0
    %1254 = vmatprep.mubr.bf16.mxu0 0
    %1255 = vmatmul.mubr.bf16.gmra.mxu0 %v1049
    %v1256 = vpop.f32.mrf.mxu0
    %v1257 = vadd.f32 %v1053, %v1256
    %v1258 = vpop.f32.mrf.mxu0
    %v1259 = vpop.f32.mrf.mxu0
    %v1260 = vadd.f32 %v1053, %v1259
    %v1261 = vpop.f32.mrf.mxu0
    %1262 = vdwg.mxu0
    %v1263 = vmax.f32 %v1137, 0.0
    %v1264 = vmax.f32 %v1140, 0.0
    %v1265 = vmax.f32 %v1145, 0.0
    %v1266 = vmax.f32 %v1148, 0.0
    %v1267 = vmax.f32 %v1153, 0.0
    %v1268 = vmax.f32 %v1156, 0.0
    %v1269 = vmax.f32 %v1161, 0.0
    %v1270 = vmax.f32 %v1164, 0.0
    %v1271 = vmax.f32 %v1169, 0.0
    %v1272 = vmax.f32 %v1172, 0.0
    %v1273 = vmax.f32 %v1177, 0.0
    %v1274 = vmax.f32 %v1180, 0.0
    %v1275 = vmax.f32 %v1185, 0.0
    %v1276 = vmax.f32 %v1188, 0.0
    %v1277 = vmax.f32 %v1193, 0.0
    %v1278 = vmax.f32 %v1196, 0.0
    %v1279 = vmax.f32 %v1201, 0.0
    %v1280 = vmax.f32 %v1204, 0.0
    %v1281 = vmax.f32 %v1209, 0.0
    %v1282 = vmax.f32 %v1212, 0.0
    %v1283 = vmax.f32 %v1217, 0.0
    %v1284 = vmax.f32 %v1220, 0.0
    %v1285 = vmax.f32 %v1225, 0.0
    %v1286 = vmax.f32 %v1228, 0.0
    %v1287 = vmax.f32 %v1233, 0.0
    %v1288 = vmax.f32 %v1236, 0.0
    %v1289 = vmax.f32 %v1241, 0.0
    %v1290 = vmax.f32 %v1244, 0.0
    %v1291 = vmax.f32 %v1249, 0.0
    %v1292 = vmax.f32 %v1252, 0.0
    %v1293 = vmax.f32 %v1257, 0.0
    %v1294 = vmax.f32 %v1260, 0.0
    %s1295 = scalar_lea.vmem [#allocation7], 192
    %v1296 = vld [vmem:[%s1295] sm:$0xf]
    %v1297 = vld [vmem:[%s1295 + $0x4] sm:$0xf]
    %v1298 = vld [vmem:[%s1295 + $0x8] sm:$0xf]
    %v1299 = vld [vmem:[%s1295 + $0xc] sm:$0xf]
    %v1300 = vld [vmem:[%s1295 + $0x10] sm:$0xf]
    %v1301 = vld [vmem:[%s1295 + $0x14] sm:$0xf]
    %v1302 = vld [vmem:[%s1295 + $0x18] sm:$0xf]
    %v1303 = vld [vmem:[%s1295 + $0x1c] sm:$0xf]
    %v1304 = vld [vmem:[%s1295 + $0x20] sm:$0xf]
    %v1305 = vld [vmem:[%s1295 + $0x24] sm:$0xf]
    %v1306 = vld [vmem:[%s1295 + $0x28] sm:$0xf]
    %v1307 = vld [vmem:[%s1295 + $0x2c] sm:$0xf]
    %v1308 = vld [vmem:[%s1295 + $0x30] sm:$0xf]
    %v1309 = vld [vmem:[%s1295 + $0x34] sm:$0xf]
    %v1310 = vld [vmem:[%s1295 + $0x38] sm:$0xf]
    %v1311 = vld [vmem:[%s1295 + $0x3c] sm:$0xf]
    %v1312 = vpack.c.bf16 %v1264, %v1263
    %v1313 = vpack.c.bf16 %v1266, %v1265
    %v1314 = vpack.c.bf16 %v1268, %v1267
    %v1315 = vpack.c.bf16 %v1270, %v1269
    %v1316 = vpack.c.bf16 %v1272, %v1271
    %v1317 = vpack.c.bf16 %v1274, %v1273
    %v1318 = vpack.c.bf16 %v1276, %v1275
    %v1319 = vpack.c.bf16 %v1278, %v1277
    %v1320 = vpack.c.bf16 %v1280, %v1279
    %v1321 = vpack.c.bf16 %v1282, %v1281
    %v1322 = vpack.c.bf16 %v1284, %v1283
    %v1323 = vpack.c.bf16 %v1286, %v1285
    %v1324 = vpack.c.bf16 %v1288, %v1287
    %v1325 = vpack.c.bf16 %v1290, %v1289
    %v1326 = vpack.c.bf16 %v1292, %v1291
    %v1327 = vpack.c.bf16 %v1294, %v1293
    %v1328 = vlaneseq
    %v1329 = vshrl.u32 %v1328, 7
    %v1330 = vsub.s32 4, %v1329
    %v1331 = vrot.slane %v72, %v1330
    %v1348 = vunpack.c.l.b16 %v1296
    %v1349 = vunpack.c.l.b16 %v1297
    %v1350 = vunpack.c.l.b16 %v1298
    %v1351 = vunpack.c.l.b16 %v1299
    %v1352 = vunpack.c.l.b16 %v1300
    %v1353 = vunpack.c.l.b16 %v1301
    %v1354 = vunpack.c.l.b16 %v1302
    %v1355 = vunpack.c.l.b16 %v1303
    %v1356 = vunpack.c.l.b16 %v1304
    %v1357 = vunpack.c.l.b16 %v1305
    %v1358 = vunpack.c.l.b16 %v1306
    %v1359 = vunpack.c.l.b16 %v1307
    %v1360 = vunpack.c.l.b16 %v1308
    %v1361 = vunpack.c.l.b16 %v1309
    %v1362 = vunpack.c.l.b16 %v1310
    %v1363 = vunpack.c.l.b16 %v1311
    %v1364 = vpack.c.b16 %v1349, %v1348
    %v1365 = vpack.c.b16 %v1351, %v1350
    %v1366 = vpack.c.b16 %v1353, %v1352
    %v1367 = vpack.c.b16 %v1355, %v1354
    %v1368 = vpack.c.b16 %v1357, %v1356
    %v1369 = vpack.c.b16 %v1359, %v1358
    %v1370 = vpack.c.b16 %v1361, %v1360
    %v1371 = vpack.c.b16 %v1363, %v1362
    %1380 = vmatprep.subr.bf16.mxu0 0
    %1381 = vmatpush1.bf16.msra.mxu0 %v1371
    %1382 = vmatprep.subr.bf16.mxu0 0
    %1383 = vmatpush1.bf16.msra.mxu0 %v1370
    %1384 = vmatprep.subr.bf16.mxu0 0
    %1385 = vmatpush1.bf16.msra.mxu0 %v1369
    %1386 = vmatprep.subr.bf16.mxu0 0
    %1387 = vmatpush1.bf16.msra.mxu0 %v1368
    %1388 = vmatprep.subr.bf16.mxu0 0
    %1389 = vmatpush1.bf16.msra.mxu0 %v1367
    %1390 = vmatprep.subr.bf16.mxu0 0
    %1391 = vmatpush1.bf16.msra.mxu0 %v1366
    %1392 = vmatprep.subr.bf16.mxu0 0
    %1393 = vmatpush1.bf16.msra.mxu0 %v1365
    %1394 = vmatprep.subr.bf16.mxu0 0
    %1395 = vmatpush1.bf16.msra.mxu0 %v1364
    %1396 = vmatprep.subr.bf16.mxu0 0
    %1397 = vmatpush2.bf16.msra.mxu0 0
    %1398 = vmatprep.subr.bf16.mxu0 0
    %1399 = vmatpush2.bf16.msra.mxu0 0
    %1400 = vmatprep.subr.bf16.mxu0 0
    %1401 = vmatpush2.bf16.msra.mxu0 0
    %1402 = vmatprep.subr.bf16.mxu0 0
    %1403 = vmatpush2.bf16.msra.mxu0 0
    %1404 = vmatprep.subr.bf16.mxu0 0
    %1405 = vmatpush2.bf16.msra.mxu0 0
    %1406 = vmatprep.subr.bf16.mxu0 0
    %1407 = vmatpush2.bf16.msra.mxu0 0
    %1408 = vmatprep.subr.bf16.mxu0 0
    %1409 = vmatpush2.bf16.msra.mxu0 0
    %1410 = vmatprep.subr.bf16.mxu0 0
    %1411 = vmatpush2.bf16.msra.mxu0 0
    %1412 = vmatprep.mubr.bf16.mxu0 0
    %1413 = vmatmul.mubr.bf16.gmra.mxu0 %v1312
    %v1414 = vpop.f32.mrf.mxu0
    %v1415 = vadd.f32 %v1331, %v1414
    %v1416 = vpop.f32.mrf.mxu0
    %v1417 = vpop.f32.mrf.mxu0
    %v1418 = vadd.f32 %v1331, %v1417
    %v1419 = vpop.f32.mrf.mxu0
    %1420 = vmatprep.mubr.bf16.mxu0 0
    %1421 = vmatmul.mubr.bf16.gmra.mxu0 %v1313
    %v1422 = vpop.f32.mrf.mxu0
    %v1423 = vadd.f32 %v1331, %v1422
    %v1424 = vpop.f32.mrf.mxu0
    %v1425 = vpop.f32.mrf.mxu0
    %v1426 = vadd.f32 %v1331, %v1425
    %v1427 = vpop.f32.mrf.mxu0
    %1428 = vmatprep.mubr.bf16.mxu0 0
    %1429 = vmatmul.mubr.bf16.gmra.mxu0 %v1314
    %v1430 = vpop.f32.mrf.mxu0
    %v1431 = vadd.f32 %v1331, %v1430
    %v1432 = vpop.f32.mrf.mxu0
    %v1433 = vpop.f32.mrf.mxu0
    %v1434 = vadd.f32 %v1331, %v1433
    %v1435 = vpop.f32.mrf.mxu0
    %1436 = vmatprep.mubr.bf16.mxu0 0
    %1437 = vmatmul.mubr.bf16.gmra.mxu0 %v1315
    %v1438 = vpop.f32.mrf.mxu0
    %v1439 = vadd.f32 %v1331, %v1438
    %v1440 = vpop.f32.mrf.mxu0
    %v1441 = vpop.f32.mrf.mxu0
    %v1442 = vadd.f32 %v1331, %v1441
    %v1443 = vpop.f32.mrf.mxu0
    %1444 = vmatprep.mubr.bf16.mxu0 0
    %1445 = vmatmul.mubr.bf16.gmra.mxu0 %v1316
    %v1446 = vpop.f32.mrf.mxu0
    %v1447 = vadd.f32 %v1331, %v1446
    %v1448 = vpop.f32.mrf.mxu0
    %v1449 = vpop.f32.mrf.mxu0
    %v1450 = vadd.f32 %v1331, %v1449
    %v1451 = vpop.f32.mrf.mxu0
    %1452 = vmatprep.mubr.bf16.mxu0 0
    %1453 = vmatmul.mubr.bf16.gmra.mxu0 %v1317
    %v1454 = vpop.f32.mrf.mxu0
    %v1455 = vadd.f32 %v1331, %v1454
    %v1456 = vpop.f32.mrf.mxu0
    %v1457 = vpop.f32.mrf.mxu0
    %v1458 = vadd.f32 %v1331, %v1457
    %v1459 = vpop.f32.mrf.mxu0
    %1460 = vmatprep.mubr.bf16.mxu0 0
    %1461 = vmatmul.mubr.bf16.gmra.mxu0 %v1318
    %v1462 = vpop.f32.mrf.mxu0
    %v1463 = vadd.f32 %v1331, %v1462
    %v1464 = vpop.f32.mrf.mxu0
    %v1465 = vpop.f32.mrf.mxu0
    %v1466 = vadd.f32 %v1331, %v1465
    %v1467 = vpop.f32.mrf.mxu0
    %1468 = vmatprep.mubr.bf16.mxu0 0
    %1469 = vmatmul.mubr.bf16.gmra.mxu0 %v1319
    %v1470 = vpop.f32.mrf.mxu0
    %v1471 = vadd.f32 %v1331, %v1470
    %v1472 = vpop.f32.mrf.mxu0
    %v1473 = vpop.f32.mrf.mxu0
    %v1474 = vadd.f32 %v1331, %v1473
    %v1475 = vpop.f32.mrf.mxu0
    %1476 = vmatprep.mubr.bf16.mxu0 0
    %1477 = vmatmul.mubr.bf16.gmra.mxu0 %v1320
    %v1478 = vpop.f32.mrf.mxu0
    %v1479 = vadd.f32 %v1331, %v1478
    %v1480 = vpop.f32.mrf.mxu0
    %v1481 = vpop.f32.mrf.mxu0
    %v1482 = vadd.f32 %v1331, %v1481
    %v1483 = vpop.f32.mrf.mxu0
    %1484 = vmatprep.mubr.bf16.mxu0 0
    %1485 = vmatmul.mubr.bf16.gmra.mxu0 %v1321
    %v1486 = vpop.f32.mrf.mxu0
    %v1487 = vadd.f32 %v1331, %v1486
    %v1488 = vpop.f32.mrf.mxu0
    %v1489 = vpop.f32.mrf.mxu0
    %v1490 = vadd.f32 %v1331, %v1489
    %v1491 = vpop.f32.mrf.mxu0
    %1492 = vmatprep.mubr.bf16.mxu0 0
    %1493 = vmatmul.mubr.bf16.gmra.mxu0 %v1322
    %v1494 = vpop.f32.mrf.mxu0
    %v1495 = vadd.f32 %v1331, %v1494
    %v1496 = vpop.f32.mrf.mxu0
    %v1497 = vpop.f32.mrf.mxu0
    %v1498 = vadd.f32 %v1331, %v1497
    %v1499 = vpop.f32.mrf.mxu0
    %1500 = vmatprep.mubr.bf16.mxu0 0
    %1501 = vmatmul.mubr.bf16.gmra.mxu0 %v1323
    %v1502 = vpop.f32.mrf.mxu0
    %v1503 = vadd.f32 %v1331, %v1502
    %v1504 = vpop.f32.mrf.mxu0
    %v1505 = vpop.f32.mrf.mxu0
    %v1506 = vadd.f32 %v1331, %v1505
    %v1507 = vpop.f32.mrf.mxu0
    %1508 = vmatprep.mubr.bf16.mxu0 0
    %1509 = vmatmul.mubr.bf16.gmra.mxu0 %v1324
    %v1510 = vpop.f32.mrf.mxu0
    %v1511 = vadd.f32 %v1331, %v1510
    %v1512 = vpop.f32.mrf.mxu0
    %v1513 = vpop.f32.mrf.mxu0
    %v1514 = vadd.f32 %v1331, %v1513
    %v1515 = vpop.f32.mrf.mxu0
    %1516 = vmatprep.mubr.bf16.mxu0 0
    %1517 = vmatmul.mubr.bf16.gmra.mxu0 %v1325
    %v1518 = vpop.f32.mrf.mxu0
    %v1519 = vadd.f32 %v1331, %v1518
    %v1520 = vpop.f32.mrf.mxu0
    %v1521 = vpop.f32.mrf.mxu0
    %v1522 = vadd.f32 %v1331, %v1521
    %v1523 = vpop.f32.mrf.mxu0
    %1524 = vmatprep.mubr.bf16.mxu0 0
    %1525 = vmatmul.mubr.bf16.gmra.mxu0 %v1326
    %v1526 = vpop.f32.mrf.mxu0
    %v1527 = vadd.f32 %v1331, %v1526
    %v1528 = vpop.f32.mrf.mxu0
    %v1529 = vpop.f32.mrf.mxu0
    %v1530 = vadd.f32 %v1331, %v1529
    %v1531 = vpop.f32.mrf.mxu0
    %1532 = vmatprep.mubr.bf16.mxu0 0
    %1533 = vmatmul.mubr.bf16.gmra.mxu0 %v1327
    %v1534 = vpop.f32.mrf.mxu0
    %v1535 = vadd.f32 %v1331, %v1534
    %v1536 = vpop.f32.mrf.mxu0
    %v1537 = vpop.f32.mrf.mxu0
    %v1538 = vadd.f32 %v1331, %v1537
    %v1539 = vpop.f32.mrf.mxu0
    %1540 = vdwg.mxu0
    %v1541 = vmax.f32 %v1415, 0.0
    %v1542 = vmax.f32 %v1418, 0.0
    %v1543 = vmax.f32 %v1423, 0.0
    %v1544 = vmax.f32 %v1426, 0.0
    %v1545 = vmax.f32 %v1431, 0.0
    %v1546 = vmax.f32 %v1434, 0.0
    %v1547 = vmax.f32 %v1439, 0.0
    %v1548 = vmax.f32 %v1442, 0.0
    %v1549 = vmax.f32 %v1447, 0.0
    %v1550 = vmax.f32 %v1450, 0.0
    %v1551 = vmax.f32 %v1455, 0.0
    %v1552 = vmax.f32 %v1458, 0.0
    %v1553 = vmax.f32 %v1463, 0.0
    %v1554 = vmax.f32 %v1466, 0.0
    %v1555 = vmax.f32 %v1471, 0.0
    %v1556 = vmax.f32 %v1474, 0.0
    %v1557 = vmax.f32 %v1479, 0.0
    %v1558 = vmax.f32 %v1482, 0.0
    %v1559 = vmax.f32 %v1487, 0.0
    %v1560 = vmax.f32 %v1490, 0.0
    %v1561 = vmax.f32 %v1495, 0.0
    %v1562 = vmax.f32 %v1498, 0.0
    %v1563 = vmax.f32 %v1503, 0.0
    %v1564 = vmax.f32 %v1506, 0.0
    %v1565 = vmax.f32 %v1511, 0.0
    %v1566 = vmax.f32 %v1514, 0.0
    %v1567 = vmax.f32 %v1519, 0.0
    %v1568 = vmax.f32 %v1522, 0.0
    %v1569 = vmax.f32 %v1527, 0.0
    %v1570 = vmax.f32 %v1530, 0.0
    %v1571 = vmax.f32 %v1535, 0.0
    %v1572 = vmax.f32 %v1538, 0.0
    %s1573 = scalar_lea.vmem [#allocation7], 256
    %v1574 = vld [vmem:[%s1573] sm:$0xf]
    %v1575 = vld [vmem:[%s1573 + $0x4] sm:$0xf]
    %v1576 = vld [vmem:[%s1573 + $0x8] sm:$0xf]
    %v1577 = vld [vmem:[%s1573 + $0xc] sm:$0xf]
    %v1578 = vld [vmem:[%s1573 + $0x10] sm:$0xf]
    %v1579 = vld [vmem:[%s1573 + $0x14] sm:$0xf]
    %v1580 = vld [vmem:[%s1573 + $0x18] sm:$0xf]
    %v1581 = vld [vmem:[%s1573 + $0x1c] sm:$0xf]
    %v1582 = vld [vmem:[%s1573 + $0x20] sm:$0xf]
    %v1583 = vld [vmem:[%s1573 + $0x24] sm:$0xf]
    %v1584 = vld [vmem:[%s1573 + $0x28] sm:$0xf]
    %v1585 = vld [vmem:[%s1573 + $0x2c] sm:$0xf]
    %v1586 = vld [vmem:[%s1573 + $0x30] sm:$0xf]
    %v1587 = vld [vmem:[%s1573 + $0x34] sm:$0xf]
    %v1588 = vld [vmem:[%s1573 + $0x38] sm:$0xf]
    %v1589 = vld [vmem:[%s1573 + $0x3c] sm:$0xf]
    %v1590 = vpack.c.bf16 %v1542, %v1541
    %v1591 = vpack.c.bf16 %v1544, %v1543
    %v1592 = vpack.c.bf16 %v1546, %v1545
    %v1593 = vpack.c.bf16 %v1548, %v1547
    %v1594 = vpack.c.bf16 %v1550, %v1549
    %v1595 = vpack.c.bf16 %v1552, %v1551
    %v1596 = vpack.c.bf16 %v1554, %v1553
    %v1597 = vpack.c.bf16 %v1556, %v1555
    %v1598 = vpack.c.bf16 %v1558, %v1557
    %v1599 = vpack.c.bf16 %v1560, %v1559
    %v1600 = vpack.c.bf16 %v1562, %v1561
    %v1601 = vpack.c.bf16 %v1564, %v1563
    %v1602 = vpack.c.bf16 %v1566, %v1565
    %v1603 = vpack.c.bf16 %v1568, %v1567
    %v1604 = vpack.c.bf16 %v1570, %v1569
    %v1605 = vpack.c.bf16 %v1572, %v1571
    %v1606 = vlaneseq
    %v1607 = vshrl.u32 %v1606, 7
    %v1608 = vsub.s32 5, %v1607
    %v1609 = vrot.slane %v72, %v1608
    %v1626 = vunpack.c.l.b16 %v1574
    %v1627 = vunpack.c.l.b16 %v1575
    %v1628 = vunpack.c.l.b16 %v1576
    %v1629 = vunpack.c.l.b16 %v1577
    %v1630 = vunpack.c.l.b16 %v1578
    %v1631 = vunpack.c.l.b16 %v1579
    %v1632 = vunpack.c.l.b16 %v1580
    %v1633 = vunpack.c.l.b16 %v1581
    %v1634 = vunpack.c.l.b16 %v1582
    %v1635 = vunpack.c.l.b16 %v1583
    %v1636 = vunpack.c.l.b16 %v1584
    %v1637 = vunpack.c.l.b16 %v1585
    %v1638 = vunpack.c.l.b16 %v1586
    %v1639 = vunpack.c.l.b16 %v1587
    %v1640 = vunpack.c.l.b16 %v1588
    %v1641 = vunpack.c.l.b16 %v1589
    %v1642 = vpack.c.b16 %v1627, %v1626
    %v1643 = vpack.c.b16 %v1629, %v1628
    %v1644 = vpack.c.b16 %v1631, %v1630
    %v1645 = vpack.c.b16 %v1633, %v1632
    %v1646 = vpack.c.b16 %v1635, %v1634
    %v1647 = vpack.c.b16 %v1637, %v1636
    %v1648 = vpack.c.b16 %v1639, %v1638
    %v1649 = vpack.c.b16 %v1641, %v1640
    %1658 = vmatprep.subr.bf16.mxu0 0
    %1659 = vmatpush1.bf16.msra.mxu0 %v1649
    %1660 = vmatprep.subr.bf16.mxu0 0
    %1661 = vmatpush1.bf16.msra.mxu0 %v1648
    %1662 = vmatprep.subr.bf16.mxu0 0
    %1663 = vmatpush1.bf16.msra.mxu0 %v1647
    %1664 = vmatprep.subr.bf16.mxu0 0
    %1665 = vmatpush1.bf16.msra.mxu0 %v1646
    %1666 = vmatprep.subr.bf16.mxu0 0
    %1667 = vmatpush1.bf16.msra.mxu0 %v1645
    %1668 = vmatprep.subr.bf16.mxu0 0
    %1669 = vmatpush1.bf16.msra.mxu0 %v1644
    %1670 = vmatprep.subr.bf16.mxu0 0
    %1671 = vmatpush1.bf16.msra.mxu0 %v1643
    %1672 = vmatprep.subr.bf16.mxu0 0
    %1673 = vmatpush1.bf16.msra.mxu0 %v1642
    %1674 = vmatprep.subr.bf16.mxu0 0
    %1675 = vmatpush2.bf16.msra.mxu0 0
    %1676 = vmatprep.subr.bf16.mxu0 0
    %1677 = vmatpush2.bf16.msra.mxu0 0
    %1678 = vmatprep.subr.bf16.mxu0 0
    %1679 = vmatpush2.bf16.msra.mxu0 0
    %1680 = vmatprep.subr.bf16.mxu0 0
    %1681 = vmatpush2.bf16.msra.mxu0 0
    %1682 = vmatprep.subr.bf16.mxu0 0
    %1683 = vmatpush2.bf16.msra.mxu0 0
    %1684 = vmatprep.subr.bf16.mxu0 0
    %1685 = vmatpush2.bf16.msra.mxu0 0
    %1686 = vmatprep.subr.bf16.mxu0 0
    %1687 = vmatpush2.bf16.msra.mxu0 0
    %1688 = vmatprep.subr.bf16.mxu0 0
    %1689 = vmatpush2.bf16.msra.mxu0 0
    %1690 = vmatprep.mubr.bf16.mxu0 0
    %1691 = vmatmul.mubr.bf16.gmra.mxu0 %v1590
    %v1692 = vpop.f32.mrf.mxu0
    %v1693 = vadd.f32 %v1609, %v1692
    %v1694 = vpop.f32.mrf.mxu0
    %v1695 = vpop.f32.mrf.mxu0
    %v1696 = vadd.f32 %v1609, %v1695
    %v1697 = vpop.f32.mrf.mxu0
    %1698 = vmatprep.mubr.bf16.mxu0 0
    %1699 = vmatmul.mubr.bf16.gmra.mxu0 %v1591
    %v1700 = vpop.f32.mrf.mxu0
    %v1701 = vadd.f32 %v1609, %v1700
    %v1702 = vpop.f32.mrf.mxu0
    %v1703 = vpop.f32.mrf.mxu0
    %v1704 = vadd.f32 %v1609, %v1703
    %v1705 = vpop.f32.mrf.mxu0
    %1706 = vmatprep.mubr.bf16.mxu0 0
    %1707 = vmatmul.mubr.bf16.gmra.mxu0 %v1592
    %v1708 = vpop.f32.mrf.mxu0
    %v1709 = vadd.f32 %v1609, %v1708
    %v1710 = vpop.f32.mrf.mxu0
    %v1711 = vpop.f32.mrf.mxu0
    %v1712 = vadd.f32 %v1609, %v1711
    %v1713 = vpop.f32.mrf.mxu0
    %1714 = vmatprep.mubr.bf16.mxu0 0
    %1715 = vmatmul.mubr.bf16.gmra.mxu0 %v1593
    %v1716 = vpop.f32.mrf.mxu0
    %v1717 = vadd.f32 %v1609, %v1716
    %v1718 = vpop.f32.mrf.mxu0
    %v1719 = vpop.f32.mrf.mxu0
    %v1720 = vadd.f32 %v1609, %v1719
    %v1721 = vpop.f32.mrf.mxu0
    %1722 = vmatprep.mubr.bf16.mxu0 0
    %1723 = vmatmul.mubr.bf16.gmra.mxu0 %v1594
    %v1724 = vpop.f32.mrf.mxu0
    %v1725 = vadd.f32 %v1609, %v1724
    %v1726 = vpop.f32.mrf.mxu0
    %v1727 = vpop.f32.mrf.mxu0
    %v1728 = vadd.f32 %v1609, %v1727
    %v1729 = vpop.f32.mrf.mxu0
    %1730 = vmatprep.mubr.bf16.mxu0 0
    %1731 = vmatmul.mubr.bf16.gmra.mxu0 %v1595
    %v1732 = vpop.f32.mrf.mxu0
    %v1733 = vadd.f32 %v1609, %v1732
    %v1734 = vpop.f32.mrf.mxu0
    %v1735 = vpop.f32.mrf.mxu0
    %v1736 = vadd.f32 %v1609, %v1735
    %v1737 = vpop.f32.mrf.mxu0
    %1738 = vmatprep.mubr.bf16.mxu0 0
    %1739 = vmatmul.mubr.bf16.gmra.mxu0 %v1596
    %v1740 = vpop.f32.mrf.mxu0
    %v1741 = vadd.f32 %v1609, %v1740
    %v1742 = vpop.f32.mrf.mxu0
    %v1743 = vpop.f32.mrf.mxu0
    %v1744 = vadd.f32 %v1609, %v1743
    %v1745 = vpop.f32.mrf.mxu0
    %1746 = vmatprep.mubr.bf16.mxu0 0
    %1747 = vmatmul.mubr.bf16.gmra.mxu0 %v1597
    %v1748 = vpop.f32.mrf.mxu0
    %v1749 = vadd.f32 %v1609, %v1748
    %v1750 = vpop.f32.mrf.mxu0
    %v1751 = vpop.f32.mrf.mxu0
    %v1752 = vadd.f32 %v1609, %v1751
    %v1753 = vpop.f32.mrf.mxu0
    %1754 = vmatprep.mubr.bf16.mxu0 0
    %1755 = vmatmul.mubr.bf16.gmra.mxu0 %v1598
    %v1756 = vpop.f32.mrf.mxu0
    %v1757 = vadd.f32 %v1609, %v1756
    %v1758 = vpop.f32.mrf.mxu0
    %v1759 = vpop.f32.mrf.mxu0
    %v1760 = vadd.f32 %v1609, %v1759
    %v1761 = vpop.f32.mrf.mxu0
    %1762 = vmatprep.mubr.bf16.mxu0 0
    %1763 = vmatmul.mubr.bf16.gmra.mxu0 %v1599
    %v1764 = vpop.f32.mrf.mxu0
    %v1765 = vadd.f32 %v1609, %v1764
    %v1766 = vpop.f32.mrf.mxu0
    %v1767 = vpop.f32.mrf.mxu0
    %v1768 = vadd.f32 %v1609, %v1767
    %v1769 = vpop.f32.mrf.mxu0
    %1770 = vmatprep.mubr.bf16.mxu0 0
    %1771 = vmatmul.mubr.bf16.gmra.mxu0 %v1600
    %v1772 = vpop.f32.mrf.mxu0
    %v1773 = vadd.f32 %v1609, %v1772
    %v1774 = vpop.f32.mrf.mxu0
    %v1775 = vpop.f32.mrf.mxu0
    %v1776 = vadd.f32 %v1609, %v1775
    %v1777 = vpop.f32.mrf.mxu0
    %1778 = vmatprep.mubr.bf16.mxu0 0
    %1779 = vmatmul.mubr.bf16.gmra.mxu0 %v1601
    %v1780 = vpop.f32.mrf.mxu0
    %v1781 = vadd.f32 %v1609, %v1780
    %v1782 = vpop.f32.mrf.mxu0
    %v1783 = vpop.f32.mrf.mxu0
    %v1784 = vadd.f32 %v1609, %v1783
    %v1785 = vpop.f32.mrf.mxu0
    %1786 = vmatprep.mubr.bf16.mxu0 0
    %1787 = vmatmul.mubr.bf16.gmra.mxu0 %v1602
    %v1788 = vpop.f32.mrf.mxu0
    %v1789 = vadd.f32 %v1609, %v1788
    %v1790 = vpop.f32.mrf.mxu0
    %v1791 = vpop.f32.mrf.mxu0
    %v1792 = vadd.f32 %v1609, %v1791
    %v1793 = vpop.f32.mrf.mxu0
    %1794 = vmatprep.mubr.bf16.mxu0 0
    %1795 = vmatmul.mubr.bf16.gmra.mxu0 %v1603
    %v1796 = vpop.f32.mrf.mxu0
    %v1797 = vadd.f32 %v1609, %v1796
    %v1798 = vpop.f32.mrf.mxu0
    %v1799 = vpop.f32.mrf.mxu0
    %v1800 = vadd.f32 %v1609, %v1799
    %v1801 = vpop.f32.mrf.mxu0
    %1802 = vmatprep.mubr.bf16.mxu0 0
    %1803 = vmatmul.mubr.bf16.gmra.mxu0 %v1604
    %v1804 = vpop.f32.mrf.mxu0
    %v1805 = vadd.f32 %v1609, %v1804
    %v1806 = vpop.f32.mrf.mxu0
    %v1807 = vpop.f32.mrf.mxu0
    %v1808 = vadd.f32 %v1609, %v1807
    %v1809 = vpop.f32.mrf.mxu0
    %1810 = vmatprep.mubr.bf16.mxu0 0
    %1811 = vmatmul.mubr.bf16.gmra.mxu0 %v1605
    %v1812 = vpop.f32.mrf.mxu0
    %v1813 = vadd.f32 %v1609, %v1812
    %v1814 = vpop.f32.mrf.mxu0
    %v1815 = vpop.f32.mrf.mxu0
    %v1816 = vadd.f32 %v1609, %v1815
    %v1817 = vpop.f32.mrf.mxu0
    %1818 = vdwg.mxu0
    %1819 = vst [vmem:[#allocation10] sm:$0xff] %v1693
    %1820 = vst [vmem:[#allocation10 + $0x8] sm:$0xff] %v1696
    %1821 = vst [vmem:[#allocation10 + $0x10] sm:$0xff] %v1701
    %1822 = vst [vmem:[#allocation10 + $0x18] sm:$0xff] %v1704
    %1823 = vst [vmem:[#allocation10 + $0x20] sm:$0xff] %v1709
    %1824 = vst [vmem:[#allocation10 + $0x28] sm:$0xff] %v1712
    %1825 = vst [vmem:[#allocation10 + $0x30] sm:$0xff] %v1717
    %1826 = vst [vmem:[#allocation10 + $0x38] sm:$0xff] %v1720
    %1827 = vst [vmem:[#allocation10 + $0x40] sm:$0xff] %v1725
    %1828 = vst [vmem:[#allocation10 + $0x48] sm:$0xff] %v1728
    %1829 = vst [vmem:[#allocation10 + $0x50] sm:$0xff] %v1733
    %1830 = vst [vmem:[#allocation10 + $0x58] sm:$0xff] %v1736
    %1831 = vst [vmem:[#allocation10 + $0x60] sm:$0xff] %v1741
    %1832 = vst [vmem:[#allocation10 + $0x68] sm:$0xff] %v1744
    %1833 = vst [vmem:[#allocation10 + $0x70] sm:$0xff] %v1749
    %1834 = vst [vmem:[#allocation10 + $0x78] sm:$0xff] %v1752
    %1835 = vst [vmem:[#allocation10 + $0x80] sm:$0xff] %v1757
    %1836 = vst [vmem:[#allocation10 + $0x88] sm:$0xff] %v1760
    %1837 = vst [vmem:[#allocation10 + $0x90] sm:$0xff] %v1765
    %1838 = vst [vmem:[#allocation10 + $0x98] sm:$0xff] %v1768
    %1839 = vst [vmem:[#allocation10 + $0xa0] sm:$0xff] %v1773
    %1840 = vst [vmem:[#allocation10 + $0xa8] sm:$0xff] %v1776
    %1841 = vst [vmem:[#allocation10 + $0xb0] sm:$0xff] %v1781
    %1842 = vst [vmem:[#allocation10 + $0xb8] sm:$0xff] %v1784
    %1843 = vst [vmem:[#allocation10 + $0xc0] sm:$0xff] %v1789
    %1844 = vst [vmem:[#allocation10 + $0xc8] sm:$0xff] %v1792
    %1845 = vst [vmem:[#allocation10 + $0xd0] sm:$0xff] %v1797
    %1846 = vst [vmem:[#allocation10 + $0xd8] sm:$0xff] %v1800
    %1847 = vst [vmem:[#allocation10 + $0xe0] sm:$0xff] %v1805
    %1848 = vst [vmem:[#allocation10 + $0xe8] sm:$0xff] %v1808
    %1849 = vst [vmem:[#allocation10 + $0xf0] sm:$0xff] %v1813
    %1850 = vst [vmem:[#allocation10 + $0xf8] sm:$0xff] %v1816
    // Predicated region
    $region34: #{tpu_custom_call.1} parent=1 // pred_check
      _
    $region35: #{tpu_custom_call.1} parent=1 // pred_check_branch
      %1852 = sbr.rel (0) target = $region37
    $region36: #{tpu_custom_call.1} parent=1 // pred_region
      %s1854 = ssub.s32 4096, 4096
      %1855 = vsyncadd [#allocation4], %s1854
      %s1856 = sshll.u32 [#allocation10], 4
      %s1857 = int_to_ptr.vmem [resolvable:$true] %s1856
      %1862 = dma.vmem_to_hbm [thread:$0]  %s1857, 4096, %s4, [#allocation4], 128, 128, 8
    $region37: #{tpu_custom_call.1} parent=1 // pred_fallthru
      _
    // Predicated region
    $region38: #{tpu_custom_call.1} parent=1 // pred_check
      _
    $region39: #{tpu_custom_call.1} parent=1 // pred_check_branch
      %1864 = sbr.rel (0) target = $region41
    $region40: #{tpu_custom_call.1} parent=1 // pred_region
      %1865 = dma.done [#allocation4], 4096
    $region41: #{tpu_custom_call.1} parent=1 // pred_fallthru
      _
    %1866 = vsyncpa [#allocation3], 1
    %1867 = vsyncpa [#allocation6], 1
    %1868 = vsyncpa [#allocation9], 1
    %1869 = vsyncpa [#allocation4], 1

</llo_original>
